<compile_context>
chip_gen: v5e
topology: v5e:2x2
jax: 0.10.0
libtpu: 0.0.40
codegen_flags: <defaults>
</compile_context>

<pallas_src>
import jax
import jax.numpy as jnp
from jax.experimental import pallas as pl
from jax.experimental.pallas import tpu as pltpu

EPS = 1e-5


# ---------------------------------------------------------------------------
# Fused per-minibatch kernel: L x (conv + norm + ReLU) + mean-pool + predict.
# Grid axis 0 = packed graph minibatch (parallel).
# ---------------------------------------------------------------------------
def gcn_fused_kernel(a_ref, h0_ref, dinv_ref, eb_ref, w_ref, bias_ref,
                     p_ref, wp_ref, bp_ref, out_ref):
    num_layers = w_ref.shape[0]

    a = a_ref[...]          # (NB, NB)  bf16  A + I   (self-loop folded)
    dinv = dinv_ref[...]    # (NB, 1)   f32   1 / (in_degree + 1)
    h = h0_ref[...]         # (NB, DP)  f32   encoded node features
    inv_n = 1.0 / h.shape[0]

    # Static unrolled layer loop (num_layers small and known at trace time).
    for l in range(num_layers):
        # message passing + degree scale + hoisted edge bias
        x = (jnp.dot(a, h.astype(jnp.bfloat16),
                     preferred_element_type=jnp.float32) * dinv
             + eb_ref[l])                                   # (NB, DP) f32
        # project_node_feat (W pre-transposed / zero-padded on host)
        rst = jnp.dot(x.astype(jnp.bfloat16), w_ref[l],
                      preferred_element_type=jnp.float32) + bias_ref[l]
        # GNN_Norm: single-pass batch stats over node axis, no affine
        s1 = jnp.sum(rst, axis=0, keepdims=True)
        s2 = jnp.sum(rst * rst, axis=0, keepdims=True)
        mu = s1 * inv_n
        var = jnp.maximum(s2 * inv_n - mu * mu, 0.0)
        # activation (ReLU); dropout = identity in eval mode
        h = jnp.maximum((rst - mu) * jax.lax.rsqrt(var + EPS), 0.0)

    # global mean pooling per graph + final prediction Linear
    g = jnp.dot(p_ref[...], h.astype(jnp.bfloat16),
                preferred_element_type=jnp.float32)          # (GB, DP)
    out_ref[...] = (jnp.dot(g.astype(jnp.bfloat16), wp_ref[...],
                            preferred_element_type=jnp.float32)
                    + bp_ref[...])                           # (GB, OP)


def gcn_forward(A_sl, h0, dinv, ebias, W_stack, b_stack, P, Wp, bp, *, out_dim):
    """Fused GCN forward over B packed graph minibatches.

    A_sl  : (B, NB, NB) bf16   adjacency + I (exact small-integer counts)
    h0    : (B, NB, DP) f32    encoded node features (lane-padded)
    dinv  : (B, NB, 1)  f32    1 / (in_degree + 1)
    ebias : (B, L, NB, DP) f32 hoisted per-layer edge bias  dinv * (C @ et_l)
    W_stack, b_stack, Wp, bp : shared layer / prediction parameters
    P     : (B, GB, NB) bf16   per-graph mean-pooling matrix
    """
    B, NB, _ = A_sl.shape
    L, _, DP = W_stack.shape
    GB = P.shape[1]
    OP = Wp.shape[1]

    out_padded = pl.pallas_call(
        gcn_fused_kernel,
        out_shape=jax.ShapeDtypeStruct((B, GB, OP), jnp.float32),
        grid=(B,),
        in_specs=[
            pl.BlockSpec((None, NB, NB), lambda b: (b, 0, 0)),      # A + I
            pl.BlockSpec((None, NB, DP), lambda b: (b, 0, 0)),      # h0
            pl.BlockSpec((None, NB, 1), lambda b: (b, 0, 0)),       # dinv
            pl.BlockSpec((None, L, NB, DP), lambda b: (b, 0, 0, 0)),  # ebias
            pl.BlockSpec((L, DP, DP), lambda b: (0, 0, 0)),         # W_stack
            pl.BlockSpec((L, 1, DP), lambda b: (0, 0, 0)),          # b_stack
            pl.BlockSpec((None, GB, NB), lambda b: (b, 0, 0)),      # P
            pl.BlockSpec((DP, OP), lambda b: (0, 0)),               # Wp
            pl.BlockSpec((1, OP), lambda b: (0, 0)),                # bp
        ],
        out_specs=pl.BlockSpec((None, GB, OP), lambda b: (b, 0, 0)),
        compiler_params=pltpu.CompilerParams(
            dimension_semantics=("parallel",)),
    )(A_sl, h0, dinv, ebias, W_stack, b_stack, P, Wp, bp)

    # strip lane padding of the output dim, flatten minibatches -> graphs
    return out_padded[:, :, :out_dim].reshape(B * GB, out_dim)


if __name__ == "__main__":
    # Small deterministic synthetic setup: 2 packed minibatches of 8 graphs
    # with 16 nodes each (NB = 128 rows -> MXU-row / sublane aligned).
    B, GB, NPG = 2, 8, 16
    NB = GB * NPG                      # 128 nodes per packed minibatch
    EG = 32                            # edges per graph
    D, O, L = 32, 8, 3                 # embed dim, output dim, layers
    NUM_ATOM, NUM_BOND = 10, 5
    DP, OP = 128, 128                  # lane-dense padded widths

    key = jax.random.PRNGKey(0)
    k_param, k_graph = jax.random.split(key)

    # ---- shared parameters (zero-padded to lane-dense widths) ----
    kp = jax.random.split(k_param, 4 + 3 * L)
    atom_table = 0.1 * jax.random.normal(kp[0], (NUM_ATOM, D), jnp.float32)
    atom_pad = jnp.zeros((NUM_ATOM, DP), jnp.float32).at[:, :D].set(atom_table)

    Ws, bs, et_list = [], [], []
    for l in range(L):
        kw, kb_, ke = kp[4 + 3 * l], kp[5 + 3 * l], kp[6 + 3 * l]
        W = jax.random.normal(kw, (D, D), jnp.float32) / jnp.sqrt(D)
        bb = 0.01 * jax.random.normal(kb_, (1, D), jnp.float32)
        et = 0.1 * jax.random.normal(ke, (NUM_BOND, D), jnp.float32)
        Ws.append(jnp.zeros((DP, DP), jnp.float32).at[:D, :D].set(W))
        bs.append(jnp.zeros((1, DP), jnp.float32).at[:, :D].set(bb))
        et_list.append(et)
    W_stack = jnp.stack(Ws).astype(jnp.bfloat16)     # (L, DP, DP)
    b_stack = jnp.stack(bs)                          # (L, 1, DP) f32

    Wp = jax.random.normal(kp[1], (D, O), jnp.float32) / jnp.sqrt(D)
    bp = 0.01 * jax.random.normal(kp[2], (1, O), jnp.float32)
    Wp_pad = jnp.zeros((DP, OP), jnp.float32).at[:D, :O].set(Wp).astype(jnp.bfloat16)
    bp_pad = jnp.zeros((1, OP), jnp.float32).at[:, :O].set(bp)

    # ---- B packed minibatches of GB random molecular-style graphs ----
    kg = jax.random.split(k_graph, B)
    A_list, h0_list, dinv_list, eb_list, P_list = [], [], [], [], []
    for b in range(B):
        ks = jax.random.split(kg[b], 4)
        # per-graph directed multigraph edges, confined to each graph's block
        src = (jax.random.randint(ks[0], (GB, EG), 0, NPG)
               + jnp.arange(GB)[:, None] * NPG).reshape(-1)
        dst = (jax.random.randint(ks[1], (GB, EG), 0, NPG)
               + jnp.arange(GB)[:, None] * NPG).reshape(-1)
        efeat = jax.random.randint(ks[2], (GB * EG,), 0, NUM_BOND)
        nfeat = jax.random.randint(ks[3], (NB,), 0, NUM_ATOM)

        A = jnp.zeros((NB, NB), jnp.float32).at[dst, src].add(1.0)   # A[v, u]
        in_deg = A.sum(axis=1)
        dinv = (1.0 / (in_deg + 1.0)).reshape(NB, 1)

        # bond-type incidence C[v, t]; hoisted edge bias dinv * (C @ et_l), f32
        C = jnp.zeros((NB, NUM_BOND), jnp.float32).at[dst, efeat].add(1.0)
        eb = jnp.stack([dinv * (C @ et_list[l]) for l in range(L)])  # (L, NB, D)
        eb = jnp.pad(eb, ((0, 0), (0, 0), (0, DP - D)))              # (L, NB, DP)

        A_sl = A + jnp.eye(NB, dtype=jnp.float32)    # fold self-loop: (A+I)@h
        assert float(A_sl.max()) <= 256.0            # exact after bf16 cast

        gid = jnp.repeat(jnp.arange(GB), NPG)
        P = jax.nn.one_hot(gid, GB, dtype=jnp.float32).T / NPG       # (GB, NB)

        A_list.append(A_sl)
        h0_list.append(atom_pad[nfeat])              # atom_encoder lookup (host)
        dinv_list.append(dinv)
        eb_list.append(eb)
        P_list.append(P)

    A_b = jnp.stack(A_list).astype(jnp.bfloat16)     # (B, NB, NB)
    h0_b = jnp.stack(h0_list)                        # (B, NB, DP) f32
    dinv_b = jnp.stack(dinv_list)                    # (B, NB, 1)  f32
    eb_b = jnp.stack(eb_list)                        # (B, L, NB, DP) f32
    P_b = jnp.stack(P_list).astype(jnp.bfloat16)     # (B, GB, NB)

    out = gcn_forward(A_b, h0_b, dinv_b, eb_b, W_stack, b_stack,
                      P_b, Wp_pad, bp_pad, out_dim=O)
    jax.block_until_ready(out)
    assert out.shape == (B * GB, O) and out.dtype == jnp.float32
    print("KERNEL_OK")
</pallas_src>

<mosaic_0001>
module attributes {stable_mosaic.version = 11 : i64} {
  func.func @gcn_fused_kernel(%arg0: i32, %arg1: memref<1x128x128xbf16, #tpu.memory_space<vmem>>, %arg2: memref<1x128x128xf32, #tpu.memory_space<vmem>>, %arg3: memref<1x128x1xf32, #tpu.memory_space<vmem>>, %arg4: memref<1x3x128x128xf32, #tpu.memory_space<vmem>>, %arg5: memref<3x128x128xbf16, #tpu.memory_space<vmem>>, %arg6: memref<3x1x128xf32, #tpu.memory_space<vmem>>, %arg7: memref<1x8x128xbf16, #tpu.memory_space<vmem>>, %arg8: memref<128x128xbf16, #tpu.memory_space<vmem>>, %arg9: memref<1x128xf32, #tpu.memory_space<vmem>>, %arg10: memref<1x8x128xf32, #tpu.memory_space<vmem>>) attributes {dimension_semantics = [#tpu.dimension_semantics<parallel>], iteration_bounds = array<i64: 2>, scalar_prefetch = 0 : i64, scratch_operands = 0 : i64, tpu.core_type = #tpu.core_type<tc>, window_params = [{transform_indices = @transform_0, window_bounds = array<i64: 1, 128, 128>}, {transform_indices = @transform_1, window_bounds = array<i64: 1, 128, 128>}, {transform_indices = @transform_2, window_bounds = array<i64: 1, 128, 1>}, {transform_indices = @transform_3, window_bounds = array<i64: 1, 3, 128, 128>}, {pipeline_mode = #tpu.pipeline_mode<synchronous>, transform_indices = @transform_4, window_bounds = array<i64: 3, 128, 128>}, {pipeline_mode = #tpu.pipeline_mode<synchronous>, transform_indices = @transform_5, window_bounds = array<i64: 3, 1, 128>}, {transform_indices = @transform_6, window_bounds = array<i64: 1, 8, 128>}, {pipeline_mode = #tpu.pipeline_mode<synchronous>, transform_indices = @transform_7, window_bounds = array<i64: 128, 128>}, {pipeline_mode = #tpu.pipeline_mode<synchronous>, transform_indices = @transform_8, window_bounds = array<i64: 1, 128>}, {transform_indices = @transform_9, window_bounds = array<i64: 1, 8, 128>}]} {
    %c0 = arith.constant 0 : index
    %c0_0 = arith.constant 0 : index
    %c0_1 = arith.constant 0 : index
    %0 = vector.load %arg1[%c0, %c0_0, %c0_1] : memref<1x128x128xbf16, #tpu.memory_space<vmem>>, vector<1x128x128xbf16>
    %1 = vector.shape_cast %0 : vector<1x128x128xbf16> to vector<128x128xbf16>
    %c0_2 = arith.constant 0 : index
    %c0_3 = arith.constant 0 : index
    %c0_4 = arith.constant 0 : index
    %2 = vector.load %arg3[%c0_2, %c0_3, %c0_4] : memref<1x128x1xf32, #tpu.memory_space<vmem>>, vector<1x128x1xf32>
    %3 = vector.shape_cast %2 : vector<1x128x1xf32> to vector<128x1xf32>
    %c0_5 = arith.constant 0 : index
    %c0_6 = arith.constant 0 : index
    %c0_7 = arith.constant 0 : index
    %4 = vector.load %arg2[%c0_5, %c0_6, %c0_7] : memref<1x128x128xf32, #tpu.memory_space<vmem>>, vector<1x128x128xf32>
    %5 = vector.shape_cast %4 : vector<1x128x128xf32> to vector<128x128xf32>
    %6 = arith.truncf %5 : vector<128x128xf32> to vector<128x128xbf16>
    %cst = arith.constant dense<0.000000e+00> : vector<128x128xf32>
    %7 = tpu.matmul %1, %6, %cst {dimension_numbers = #tpu.dot_dimension_numbers<[1], [0], [0], [1], [0, 0, 1, 1], [], []>} : vector<128x128xbf16>, vector<128x128xbf16>, vector<128x128xf32> -> vector<128x128xf32>
    %8 = vector.broadcast %3 : vector<128x1xf32> to vector<128x128xf32>
    %9 = arith.mulf %7, %8 : vector<128x128xf32>
    %c0_8 = arith.constant 0 : index
    %c0_9 = arith.constant 0 : index
    %c0_10 = arith.constant 0 : index
    %c0_11 = arith.constant 0 : index
    %10 = vector.load %arg4[%c0_8, %c0_9, %c0_10, %c0_11] : memref<1x3x128x128xf32, #tpu.memory_space<vmem>>, vector<1x1x128x128xf32>
    %11 = vector.shape_cast %10 : vector<1x1x128x128xf32> to vector<128x128xf32>
    %12 = arith.addf %9, %11 : vector<128x128xf32>
    %13 = arith.truncf %12 : vector<128x128xf32> to vector<128x128xbf16>
    %c0_12 = arith.constant 0 : index
    %c0_13 = arith.constant 0 : index
    %c0_14 = arith.constant 0 : index
    %14 = vector.load %arg5[%c0_12, %c0_13, %c0_14] : memref<3x128x128xbf16, #tpu.memory_space<vmem>>, vector<1x128x128xbf16>
    %15 = vector.shape_cast %14 : vector<1x128x128xbf16> to vector<128x128xbf16>
    %cst_15 = arith.constant dense<0.000000e+00> : vector<128x128xf32>
    %16 = tpu.matmul %13, %15, %cst_15 {dimension_numbers = #tpu.dot_dimension_numbers<[1], [0], [0], [1], [0, 0, 1, 1], [], []>} : vector<128x128xbf16>, vector<128x128xbf16>, vector<128x128xf32> -> vector<128x128xf32>
    %c0_16 = arith.constant 0 : index
    %c0_17 = arith.constant 0 : index
    %c0_18 = arith.constant 0 : index
    %17 = vector.load %arg6[%c0_16, %c0_17, %c0_18] : memref<3x1x128xf32, #tpu.memory_space<vmem>>, vector<1x1x128xf32>
    %18 = vector.shape_cast %17 : vector<1x1x128xf32> to vector<1x128xf32>
    %19 = vector.broadcast %18 : vector<1x128xf32> to vector<128x128xf32>
    %20 = arith.addf %16, %19 : vector<128x128xf32>
    %cst_19 = arith.constant dense<0.000000e+00> : vector<128xf32>
    %21 = vector.multi_reduction <add>, %20, %cst_19 [0] : vector<128x128xf32> to vector<128xf32>
    %22 = vector.shape_cast %21 : vector<128xf32> to vector<1x128xf32>
    %23 = arith.mulf %20, %20 : vector<128x128xf32>
    %cst_20 = arith.constant dense<0.000000e+00> : vector<128xf32>
    %24 = vector.multi_reduction <add>, %23, %cst_20 [0] : vector<128x128xf32> to vector<128xf32>
    %25 = vector.shape_cast %24 : vector<128xf32> to vector<1x128xf32>
    %cst_21 = arith.constant 7.812500e-03 : f32
    %26 = vector.broadcast %cst_21 : f32 to vector<1x128xf32>
    %27 = arith.mulf %22, %26 : vector<1x128xf32>
    %cst_22 = arith.constant 7.812500e-03 : f32
    %28 = vector.broadcast %cst_22 : f32 to vector<1x128xf32>
    %29 = arith.mulf %25, %28 : vector<1x128xf32>
    %30 = arith.mulf %27, %27 : vector<1x128xf32>
    %31 = arith.subf %29, %30 : vector<1x128xf32>
    %cst_23 = arith.constant 0.000000e+00 : f32
    %32 = vector.broadcast %cst_23 : f32 to vector<1x128xf32>
    %33 = arith.maximumf %31, %32 : vector<1x128xf32>
    %34 = vector.broadcast %27 : vector<1x128xf32> to vector<128x128xf32>
    %35 = arith.subf %20, %34 : vector<128x128xf32>
    %cst_24 = arith.constant 9.99999974E-6 : f32
    %36 = vector.broadcast %cst_24 : f32 to vector<1x128xf32>
    %37 = arith.addf %33, %36 : vector<1x128xf32>
    %38 = math.rsqrt %37 : vector<1x128xf32>
    %39 = vector.broadcast %38 : vector<1x128xf32> to vector<128x128xf32>
    %40 = arith.mulf %35, %39 : vector<128x128xf32>
    %cst_25 = arith.constant 0.000000e+00 : f32
    %41 = vector.broadcast %cst_25 : f32 to vector<128x128xf32>
    %42 = arith.maximumf %40, %41 : vector<128x128xf32>
    %43 = arith.truncf %42 : vector<128x128xf32> to vector<128x128xbf16>
    %cst_26 = arith.constant dense<0.000000e+00> : vector<128x128xf32>
    %44 = tpu.matmul %1, %43, %cst_26 {dimension_numbers = #tpu.dot_dimension_numbers<[1], [0], [0], [1], [0, 0, 1, 1], [], []>} : vector<128x128xbf16>, vector<128x128xbf16>, vector<128x128xf32> -> vector<128x128xf32>
    %45 = vector.broadcast %3 : vector<128x1xf32> to vector<128x128xf32>
    %46 = arith.mulf %44, %45 : vector<128x128xf32>
    %c0_27 = arith.constant 0 : index
    %c1 = arith.constant 1 : index
    %c0_28 = arith.constant 0 : index
    %c0_29 = arith.constant 0 : index
    %47 = vector.load %arg4[%c0_27, %c1, %c0_28, %c0_29] : memref<1x3x128x128xf32, #tpu.memory_space<vmem>>, vector<1x1x128x128xf32>
    %48 = vector.shape_cast %47 : vector<1x1x128x128xf32> to vector<128x128xf32>
    %49 = arith.addf %46, %48 : vector<128x128xf32>
    %50 = arith.truncf %49 : vector<128x128xf32> to vector<128x128xbf16>
    %c1_30 = arith.constant 1 : index
    %c0_31 = arith.constant 0 : index
    %c0_32 = arith.constant 0 : index
    %51 = vector.load %arg5[%c1_30, %c0_31, %c0_32] : memref<3x128x128xbf16, #tpu.memory_space<vmem>>, vector<1x128x128xbf16>
    %52 = vector.shape_cast %51 : vector<1x128x128xbf16> to vector<128x128xbf16>
    %cst_33 = arith.constant dense<0.000000e+00> : vector<128x128xf32>
    %53 = tpu.matmul %50, %52, %cst_33 {dimension_numbers = #tpu.dot_dimension_numbers<[1], [0], [0], [1], [0, 0, 1, 1], [], []>} : vector<128x128xbf16>, vector<128x128xbf16>, vector<128x128xf32> -> vector<128x128xf32>
    %c1_34 = arith.constant 1 : index
    %c0_35 = arith.constant 0 : index
    %c0_36 = arith.constant 0 : index
    %54 = vector.load %arg6[%c1_34, %c0_35, %c0_36] : memref<3x1x128xf32, #tpu.memory_space<vmem>>, vector<1x1x128xf32>
    %55 = vector.shape_cast %54 : vector<1x1x128xf32> to vector<1x128xf32>
    %56 = vector.broadcast %55 : vector<1x128xf32> to vector<128x128xf32>
    %57 = arith.addf %53, %56 : vector<128x128xf32>
    %cst_37 = arith.constant dense<0.000000e+00> : vector<128xf32>
    %58 = vector.multi_reduction <add>, %57, %cst_37 [0] : vector<128x128xf32> to vector<128xf32>
    %59 = vector.shape_cast %58 : vector<128xf32> to vector<1x128xf32>
    %60 = arith.mulf %57, %57 : vector<128x128xf32>
    %cst_38 = arith.constant dense<0.000000e+00> : vector<128xf32>
    %61 = vector.multi_reduction <add>, %60, %cst_38 [0] : vector<128x128xf32> to vector<128xf32>
    %62 = vector.shape_cast %61 : vector<128xf32> to vector<1x128xf32>
    %cst_39 = arith.constant 7.812500e-03 : f32
    %63 = vector.broadcast %cst_39 : f32 to vector<1x128xf32>
    %64 = arith.mulf %59, %63 : vector<1x128xf32>
    %cst_40 = arith.constant 7.812500e-03 : f32
    %65 = vector.broadcast %cst_40 : f32 to vector<1x128xf32>
    %66 = arith.mulf %62, %65 : vector<1x128xf32>
    %67 = arith.mulf %64, %64 : vector<1x128xf32>
    %68 = arith.subf %66, %67 : vector<1x128xf32>
    %cst_41 = arith.constant 0.000000e+00 : f32
    %69 = vector.broadcast %cst_41 : f32 to vector<1x128xf32>
    %70 = arith.maximumf %68, %69 : vector<1x128xf32>
    %71 = vector.broadcast %64 : vector<1x128xf32> to vector<128x128xf32>
    %72 = arith.subf %57, %71 : vector<128x128xf32>
    %cst_42 = arith.constant 9.99999974E-6 : f32
    %73 = vector.broadcast %cst_42 : f32 to vector<1x128xf32>
    %74 = arith.addf %70, %73 : vector<1x128xf32>
    %75 = math.rsqrt %74 : vector<1x128xf32>
    %76 = vector.broadcast %75 : vector<1x128xf32> to vector<128x128xf32>
    %77 = arith.mulf %72, %76 : vector<128x128xf32>
    %cst_43 = arith.constant 0.000000e+00 : f32
    %78 = vector.broadcast %cst_43 : f32 to vector<128x128xf32>
    %79 = arith.maximumf %77, %78 : vector<128x128xf32>
    %80 = arith.truncf %79 : vector<128x128xf32> to vector<128x128xbf16>
    %cst_44 = arith.constant dense<0.000000e+00> : vector<128x128xf32>
    %81 = tpu.matmul %1, %80, %cst_44 {dimension_numbers = #tpu.dot_dimension_numbers<[1], [0], [0], [1], [0, 0, 1, 1], [], []>} : vector<128x128xbf16>, vector<128x128xbf16>, vector<128x128xf32> -> vector<128x128xf32>
    %82 = vector.broadcast %3 : vector<128x1xf32> to vector<128x128xf32>
    %83 = arith.mulf %81, %82 : vector<128x128xf32>
    %c0_45 = arith.constant 0 : index
    %c2 = arith.constant 2 : index
    %c0_46 = arith.constant 0 : index
    %c0_47 = arith.constant 0 : index
    %84 = vector.load %arg4[%c0_45, %c2, %c0_46, %c0_47] : memref<1x3x128x128xf32, #tpu.memory_space<vmem>>, vector<1x1x128x128xf32>
    %85 = vector.shape_cast %84 : vector<1x1x128x128xf32> to vector<128x128xf32>
    %86 = arith.addf %83, %85 : vector<128x128xf32>
    %87 = arith.truncf %86 : vector<128x128xf32> to vector<128x128xbf16>
    %c2_48 = arith.constant 2 : index
    %c0_49 = arith.constant 0 : index
    %c0_50 = arith.constant 0 : index
    %88 = vector.load %arg5[%c2_48, %c0_49, %c0_50] : memref<3x128x128xbf16, #tpu.memory_space<vmem>>, vector<1x128x128xbf16>
    %89 = vector.shape_cast %88 : vector<1x128x128xbf16> to vector<128x128xbf16>
    %cst_51 = arith.constant dense<0.000000e+00> : vector<128x128xf32>
    %90 = tpu.matmul %87, %89, %cst_51 {dimension_numbers = #tpu.dot_dimension_numbers<[1], [0], [0], [1], [0, 0, 1, 1], [], []>} : vector<128x128xbf16>, vector<128x128xbf16>, vector<128x128xf32> -> vector<128x128xf32>
    %c2_52 = arith.constant 2 : index
    %c0_53 = arith.constant 0 : index
    %c0_54 = arith.constant 0 : index
    %91 = vector.load %arg6[%c2_52, %c0_53, %c0_54] : memref<3x1x128xf32, #tpu.memory_space<vmem>>, vector<1x1x128xf32>
    %92 = vector.shape_cast %91 : vector<1x1x128xf32> to vector<1x128xf32>
    %93 = vector.broadcast %92 : vector<1x128xf32> to vector<128x128xf32>
    %94 = arith.addf %90, %93 : vector<128x128xf32>
    %cst_55 = arith.constant dense<0.000000e+00> : vector<128xf32>
    %95 = vector.multi_reduction <add>, %94, %cst_55 [0] : vector<128x128xf32> to vector<128xf32>
    %96 = vector.shape_cast %95 : vector<128xf32> to vector<1x128xf32>
    %97 = arith.mulf %94, %94 : vector<128x128xf32>
    %cst_56 = arith.constant dense<0.000000e+00> : vector<128xf32>
    %98 = vector.multi_reduction <add>, %97, %cst_56 [0] : vector<128x128xf32> to vector<128xf32>
    %99 = vector.shape_cast %98 : vector<128xf32> to vector<1x128xf32>
    %cst_57 = arith.constant 7.812500e-03 : f32
    %100 = vector.broadcast %cst_57 : f32 to vector<1x128xf32>
    %101 = arith.mulf %96, %100 : vector<1x128xf32>
    %cst_58 = arith.constant 7.812500e-03 : f32
    %102 = vector.broadcast %cst_58 : f32 to vector<1x128xf32>
    %103 = arith.mulf %99, %102 : vector<1x128xf32>
    %104 = arith.mulf %101, %101 : vector<1x128xf32>
    %105 = arith.subf %103, %104 : vector<1x128xf32>
    %cst_59 = arith.constant 0.000000e+00 : f32
    %106 = vector.broadcast %cst_59 : f32 to vector<1x128xf32>
    %107 = arith.maximumf %105, %106 : vector<1x128xf32>
    %108 = vector.broadcast %101 : vector<1x128xf32> to vector<128x128xf32>
    %109 = arith.subf %94, %108 : vector<128x128xf32>
    %cst_60 = arith.constant 9.99999974E-6 : f32
    %110 = vector.broadcast %cst_60 : f32 to vector<1x128xf32>
    %111 = arith.addf %107, %110 : vector<1x128xf32>
    %112 = math.rsqrt %111 : vector<1x128xf32>
    %113 = vector.broadcast %112 : vector<1x128xf32> to vector<128x128xf32>
    %114 = arith.mulf %109, %113 : vector<128x128xf32>
    %cst_61 = arith.constant 0.000000e+00 : f32
    %115 = vector.broadcast %cst_61 : f32 to vector<128x128xf32>
    %116 = arith.maximumf %114, %115 : vector<128x128xf32>
    %c0_62 = arith.constant 0 : index
    %c0_63 = arith.constant 0 : index
    %c0_64 = arith.constant 0 : index
    %117 = vector.load %arg7[%c0_62, %c0_63, %c0_64] : memref<1x8x128xbf16, #tpu.memory_space<vmem>>, vector<1x8x128xbf16>
    %118 = vector.shape_cast %117 : vector<1x8x128xbf16> to vector<8x128xbf16>
    %119 = arith.truncf %116 : vector<128x128xf32> to vector<128x128xbf16>
    %cst_65 = arith.constant dense<0.000000e+00> : vector<8x128xf32>
    %120 = tpu.matmul %118, %119, %cst_65 {dimension_numbers = #tpu.dot_dimension_numbers<[1], [0], [0], [1], [0, 0, 1, 1], [], []>} : vector<8x128xbf16>, vector<128x128xbf16>, vector<8x128xf32> -> vector<8x128xf32>
    %121 = arith.truncf %120 : vector<8x128xf32> to vector<8x128xbf16>
    %c0_66 = arith.constant 0 : index
    %c0_67 = arith.constant 0 : index
    %122 = vector.load %arg8[%c0_66, %c0_67] : memref<128x128xbf16, #tpu.memory_space<vmem>>, vector<128x128xbf16>
    %cst_68 = arith.constant dense<0.000000e+00> : vector<8x128xf32>
    %123 = tpu.matmul %121, %122, %cst_68 {dimension_numbers = #tpu.dot_dimension_numbers<[1], [0], [0], [1], [0, 0, 1, 1], [], []>} : vector<8x128xbf16>, vector<128x128xbf16>, vector<8x128xf32> -> vector<8x128xf32>
    %c0_69 = arith.constant 0 : index
    %c0_70 = arith.constant 0 : index
    %124 = vector.load %arg9[%c0_69, %c0_70] : memref<1x128xf32, #tpu.memory_space<vmem>>, vector<1x128xf32>
    %125 = vector.broadcast %124 : vector<1x128xf32> to vector<8x128xf32>
    %126 = arith.addf %123, %125 : vector<8x128xf32>
    %c0_71 = arith.constant 0 : index
    %c0_72 = arith.constant 0 : index
    %c0_73 = arith.constant 0 : index
    %127 = vector.load %arg10[%c0_71, %c0_72, %c0_73] : memref<1x8x128xf32, #tpu.memory_space<vmem>>, vector<1x8x128xf32>
    %128 = vector.shape_cast %127 : vector<1x8x128xf32> to vector<8x128xf32>
    %129 = vector.shape_cast %126 : vector<8x128xf32> to vector<1x8x128xf32>
    tpu.vector_store %arg10[%c0_71, %c0_72, %c0_73], %129 {strides = array<i32>} : memref<1x8x128xf32, #tpu.memory_space<vmem>>, vector<1x8x128xf32>,
    return
  }
  func.func @transform_0(%arg0: i32) -> (i32, i32, i32) {
    %c0_i32 = arith.constant 0 : i32
    %c0_i32_0 = arith.constant 0 : i32
    %c0_i32_1 = arith.constant 0 : i32
    return %arg0, %c0_i32, %c0_i32_0 : i32, i32, i32
  }
  func.func @transform_1(%arg0: i32) -> (i32, i32, i32) {
    %c0_i32 = arith.constant 0 : i32
    %c0_i32_0 = arith.constant 0 : i32
    %c0_i32_1 = arith.constant 0 : i32
    return %arg0, %c0_i32, %c0_i32_0 : i32, i32, i32
  }
  func.func @transform_2(%arg0: i32) -> (i32, i32, i32) {
    %c0_i32 = arith.constant 0 : i32
    %c0_i32_0 = arith.constant 0 : i32
    %c0_i32_1 = arith.constant 0 : i32
    return %arg0, %c0_i32, %c0_i32_0 : i32, i32, i32
  }
  func.func @transform_3(%arg0: i32) -> (i32, i32, i32, i32) {
    %c0_i32 = arith.constant 0 : i32
    %c0_i32_0 = arith.constant 0 : i32
    %c0_i32_1 = arith.constant 0 : i32
    %c0_i32_2 = arith.constant 0 : i32
    return %arg0, %c0_i32, %c0_i32_0, %c0_i32_1 : i32, i32, i32, i32
  }
  func.func @transform_4(%arg0: i32) -> (i32, i32, i32) {
    %c0_i32 = arith.constant 0 : i32
    %c0_i32_0 = arith.constant 0 : i32
    %c0_i32_1 = arith.constant 0 : i32
    %c0_i32_2 = arith.constant 0 : i32
    return %c0_i32, %c0_i32_0, %c0_i32_1 : i32, i32, i32
  }
  func.func @transform_5(%arg0: i32) -> (i32, i32, i32) {
    %c0_i32 = arith.constant 0 : i32
    %c0_i32_0 = arith.constant 0 : i32
    %c0_i32_1 = arith.constant 0 : i32
    %c0_i32_2 = arith.constant 0 : i32
    return %c0_i32, %c0_i32_0, %c0_i32_1 : i32, i32, i32
  }
  func.func @transform_6(%arg0: i32) -> (i32, i32, i32) {
    %c0_i32 = arith.constant 0 : i32
    %c0_i32_0 = arith.constant 0 : i32
    %c0_i32_1 = arith.constant 0 : i32
    return %arg0, %c0_i32, %c0_i32_0 : i32, i32, i32
  }
  func.func @transform_7(%arg0: i32) -> (i32, i32) {
    %c0_i32 = arith.constant 0 : i32
    %c0_i32_0 = arith.constant 0 : i32
    %c0_i32_1 = arith.constant 0 : i32
    return %c0_i32, %c0_i32_0 : i32, i32
  }
  func.func @transform_8(%arg0: i32) -> (i32, i32) {
    %c0_i32 = arith.constant 0 : i32
    %c0_i32_0 = arith.constant 0 : i32
    %c0_i32_1 = arith.constant 0 : i32
    return %c0_i32, %c0_i32_0 : i32, i32
  }
  func.func @transform_9(%arg0: i32) -> (i32, i32, i32) {
    %c0_i32 = arith.constant 0 : i32
    %c0_i32_0 = arith.constant 0 : i32
    %c0_i32_1 = arith.constant 0 : i32
    return %arg0, %c0_i32, %c0_i32_0 : i32, i32, i32
  }
}

</mosaic_0001>

<llo_original>
// kernel: tpu_custom_call.1
$region0: #{tpu_custom_call.1}
  #allocation0 [shape = 'u32[]', space=smem, size = 0x4, offset = 0x4, fixed_abs, tag = 'smem constant byte address 0x4 - core index']
  #allocation1 [shape = 'u32[72,128]{1,0:T(1,128)}', space=vmem, size = 0x9000, scoped, tag = 'internal scratch']
  %s0 = inlined_call_operand.hbm [shape: bf16[2,128,128], index: 0, kind: input, shape index: {}]
  %s1 = inlined_call_operand.vmem [shape: f32[2,128,128], index: 1, kind: input, shape index: {}]
  %s2 = inlined_call_operand.vmem [shape: f32[2,128,1], index: 2, kind: input, shape index: {}]
  %s3 = inlined_call_operand.hbm [shape: f32[2,3,128,128], index: 3, kind: input, shape index: {}]
  %s4 = inlined_call_operand.hbm [shape: bf16[3,128,128], index: 4, kind: input, shape index: {}]
  %s5 = inlined_call_operand.vmem [shape: f32[3,1,128], index: 5, kind: input, shape index: {}]
  %s6 = inlined_call_operand.hbm [shape: bf16[2,8,128], index: 6, kind: input, shape index: {}]
  %s7 = inlined_call_operand.hbm [shape: bf16[128,128], index: 7, kind: input, shape index: {}]
  %s8 = inlined_call_operand.vmem [shape: f32[1,128], index: 8, kind: input, shape index: {}]
  %s9 = inlined_call_operand.hbm [shape: f32[2,8,128], index: 9, kind: output, shape index: {}]
  %s10 = sld [smem:[#allocation0]]
  $region89: #{tpu_custom_call.1} parent=0
    _
  %s12 = ssub.s32 1, %s10
  %s13 = scalar_select 0, %s12, %s10
  $region1: #{tpu_custom_call.1} parent=0
    #allocation2 [shape = 'u8[65536]{0}', space=vmem, size = 0x10000, scoped, tag = 'input window, operand 0']
    #allocation3 [shape = 's32[2]{0}', space=sflag, size = 0x8, scoped, tag = 'scoped memory for tpu_custom_call.1']
    #allocation4 [shape = 's32[2]{0}', space=sflag, size = 0x8, scoped, tag = 'scoped memory for tpu_custom_call.1']
    #allocation5 [shape = 'u8[393216]{0}', space=vmem, size = 0x60000, scoped, tag = 'input window, operand 3']
    #allocation6 [shape = 's32[2]{0}', space=sflag, size = 0x8, scoped, tag = 'scoped memory for tpu_custom_call.1']
    #allocation7 [shape = 'u8[98304]{0}', space=vmem, size = 0x18000, scoped, tag = 'input window, operand 4, single buffered']
    #allocation8 [shape = 'u8[4096]{0}', space=vmem, size = 0x1000, scoped, tag = 'input window, operand 6']
    #allocation9 [shape = 's32[2]{0}', space=sflag, size = 0x8, scoped, tag = 'scoped memory for tpu_custom_call.1']
    #allocation10 [shape = 'u8[32768]{0}', space=vmem, size = 0x8000, scoped, tag = 'input window, operand 7, single buffered']
    #allocation11 [shape = 'u8[8192]{0}', space=vmem, size = 0x2000, scoped, tag = 'output window, operand 0']
    %14 = vsyncpa [#allocation3], 0
    %s15 = scalar_lea.sflag [#allocation3], 1
    %16 = vsyncpa %s15, 0
    %17 = vsyncpa [#allocation6], 0
    %s18 = scalar_lea.sflag [#allocation6], 1
    %19 = vsyncpa %s18, 0
    %20 = vsyncpa [#allocation9], 0
    %s21 = scalar_lea.sflag [#allocation9], 1
    %22 = vsyncpa %s21, 0
    %23 = vsyncpa [#allocation4], 0
    %s24 = scalar_lea.sflag [#allocation4], 1
    %25 = vsyncpa %s24, 0
    loop: start=0, step=1, limit=4
    $region2: #{tpu_custom_call.1} parent=1 // loop_pre_header
      _
    $region3: #{tpu_custom_call.1} parent=1 // loop_header
      %s27 = sphi 0, %s31
      %p28 = scmp.ge.s32.totalorder %s27, 4
      %s37 = sphi 0, %s39
      %s40 = sphi 0, %s37
      %s41 = sphi 0, %s40
      %s57 = sphi 0, %s41
      %s63 = sphi 0, %s65
      %s66 = sphi 0, %s63
      %s67 = sphi 0, %s66
      %s83 = sphi 0, %s67
      %s89 = sphi 0, %s91
      %s92 = sphi 0, %s89
      %s93 = sphi 0, %s92
      %s109 = sphi 0, %s93
      %s115 = sphi 0, %s117
      %s118 = sphi 0, %s115
      %s119 = sphi 0, %s118
      %s135 = sphi 0, %s119
      %s139 = sphi 0, %s139
      %s141 = sphi 0, %s139
      %s142 = sphi 0, %s141
      %s156 = sphi 0, %s142
      %s160 = sphi 0, %s160
      %s162 = sphi 0, %s160
      %s163 = sphi 0, %s162
      %s177 = sphi 0, %s163
      %s183 = sphi 0, %s185
      %s186 = sphi 0, %s183
      %s187 = sphi 0, %s186
      %s203 = sphi 0, %s187
      %s207 = sphi 0, %s207
      %s209 = sphi 0, %s207
      %s210 = sphi 0, %s209
      %s224 = sphi 0, %s210
      %s228 = sphi 0, %s228
      %s230 = sphi 0, %s228
      %s231 = sphi 0, %s230
      %s245 = sphi 0, %s231
      %s251 = sphi 0, %s253
      %s254 = sphi 0, %s251
      %s255 = sphi 0, %s254
      %s271 = sphi 0, %s255
    $region4: #{tpu_custom_call.1} parent=1 // loop_header_branch
      %30 = sbr.rel (%p28) target = $region8
    $region5: #{tpu_custom_call.1} parent=1 // loop_body
      %s32 = ssub.s32 %s27, 1
      %s33 = ssub.s32 %s27, 2
      %s34 = sadd.s32 %s27, 1
      %s35 = ssub.s32 %s27, %s34
      %p36 = scmp.eq.s32.totalorder %s35, 0
      %s38 = sadd.s32 %s37, 1
      %s39 = scalar_select %p36, %s37, %s38
      %p42 = pneg %p36
      %p43 = scmp.eq.s32.totalorder %s27, 1
      %p44 = por %p42, %p43
      %p45 = scmp.ne.s32.totalorder %s37, %s40
      %p46 = scmp.eq.s32.totalorder %s27, 0
      %p47 = por %p45, %p46
      %p48 = scmp.ne.s32.totalorder %s37, %s40
      %p49 = scmp.eq.s32.totalorder %s32, 1
      %p50 = por %p48, %p49
      %p51 = scmp.ne.s32.totalorder %s40, %s41
      %p52 = scmp.eq.s32.totalorder %s32, 0
      %p53 = por %p51, %p52
      %p54 = scmp.ne.s32.totalorder %s40, %s41
      %p55 = scmp.eq.s32.totalorder %s33, 1
      %p56 = por %p54, %p55
      %p58 = scmp.ne.s32.totalorder %s41, %s57
      %p59 = scmp.eq.s32.totalorder %s33, 0
      %p60 = por %p58, %p59
      %s61 = ssub.s32 %s27, %s34
      %p62 = scmp.eq.s32.totalorder %s61, 0
      %s64 = sadd.s32 %s63, 1
      %s65 = scalar_select %p62, %s63, %s64
      %p68 = pneg %p62
      %p69 = scmp.eq.s32.totalorder %s27, 1
      %p70 = por %p68, %p69
      %p71 = scmp.ne.s32.totalorder %s63, %s66
      %p72 = scmp.eq.s32.totalorder %s27, 0
      %p73 = por %p71, %p72
      %p74 = scmp.ne.s32.totalorder %s63, %s66
      %p75 = scmp.eq.s32.totalorder %s32, 1
      %p76 = por %p74, %p75
      %p77 = scmp.ne.s32.totalorder %s66, %s67
      %p78 = scmp.eq.s32.totalorder %s32, 0
      %p79 = por %p77, %p78
      %p80 = scmp.ne.s32.totalorder %s66, %s67
      %p81 = scmp.eq.s32.totalorder %s33, 1
      %p82 = por %p80, %p81
      %p84 = scmp.ne.s32.totalorder %s67, %s83
      %p85 = scmp.eq.s32.totalorder %s33, 0
      %p86 = por %p84, %p85
      %s87 = ssub.s32 %s27, %s34
      %p88 = scmp.eq.s32.totalorder %s87, 0
      %s90 = sadd.s32 %s89, 1
      %s91 = scalar_select %p88, %s89, %s90
      %p94 = pneg %p88
      %p95 = scmp.eq.s32.totalorder %s27, 1
      %p96 = por %p94, %p95
      %p97 = scmp.ne.s32.totalorder %s89, %s92
      %p98 = scmp.eq.s32.totalorder %s27, 0
      %p99 = por %p97, %p98
      %p100 = scmp.ne.s32.totalorder %s89, %s92
      %p101 = scmp.eq.s32.totalorder %s32, 1
      %p102 = por %p100, %p101
      %p103 = scmp.ne.s32.totalorder %s92, %s93
      %p104 = scmp.eq.s32.totalorder %s32, 0
      %p105 = por %p103, %p104
      %p106 = scmp.ne.s32.totalorder %s92, %s93
      %p107 = scmp.eq.s32.totalorder %s33, 1
      %p108 = por %p106, %p107
      %p110 = scmp.ne.s32.totalorder %s93, %s109
      %p111 = scmp.eq.s32.totalorder %s33, 0
      %p112 = por %p110, %p111
      %s113 = ssub.s32 %s27, %s34
      %p114 = scmp.eq.s32.totalorder %s113, 0
      %s116 = sadd.s32 %s115, 1
      %s117 = scalar_select %p114, %s115, %s116
      %p120 = pneg %p114
      %p121 = scmp.eq.s32.totalorder %s27, 1
      %p122 = por %p120, %p121
      %p123 = scmp.ne.s32.totalorder %s115, %s118
      %p124 = scmp.eq.s32.totalorder %s27, 0
      %p125 = por %p123, %p124
      %p126 = scmp.ne.s32.totalorder %s115, %s118
      %p127 = scmp.eq.s32.totalorder %s32, 1
      %p128 = por %p126, %p127
      %p129 = scmp.ne.s32.totalorder %s118, %s119
      %p130 = scmp.eq.s32.totalorder %s32, 0
      %p131 = por %p129, %p130
      %p132 = scmp.ne.s32.totalorder %s118, %s119
      %p133 = scmp.eq.s32.totalorder %s33, 1
      %p134 = por %p132, %p133
      %p136 = scmp.ne.s32.totalorder %s119, %s135
      %p137 = scmp.eq.s32.totalorder %s33, 0
      %p138 = por %p136, %p137
      %s140 = sadd.s32 %s139, 1
      %p143 = scmp.eq.s32.totalorder %s27, 1
      %p144 = scmp.ne.s32.totalorder %s139, %s141
      %p145 = scmp.eq.s32.totalorder %s27, 0
      %p146 = por %p144, %p145
      %p147 = scmp.ne.s32.totalorder %s139, %s141
      %p148 = scmp.eq.s32.totalorder %s32, 1
      %p149 = por %p147, %p148
      %p150 = scmp.ne.s32.totalorder %s141, %s142
      %p151 = scmp.eq.s32.totalorder %s32, 0
      %p152 = por %p150, %p151
      %p153 = scmp.ne.s32.totalorder %s141, %s142
      %p154 = scmp.eq.s32.totalorder %s33, 1
      %p155 = por %p153, %p154
      %p157 = scmp.ne.s32.totalorder %s142, %s156
      %p158 = scmp.eq.s32.totalorder %s33, 0
      %p159 = por %p157, %p158
      %s161 = sadd.s32 %s160, 1
      %p164 = scmp.eq.s32.totalorder %s27, 1
      %p165 = scmp.ne.s32.totalorder %s160, %s162
      %p166 = scmp.eq.s32.totalorder %s27, 0
      %p167 = por %p165, %p166
      %p168 = scmp.ne.s32.totalorder %s160, %s162
      %p169 = scmp.eq.s32.totalorder %s32, 1
      %p170 = por %p168, %p169
      %p171 = scmp.ne.s32.totalorder %s162, %s163
      %p172 = scmp.eq.s32.totalorder %s32, 0
      %p173 = por %p171, %p172
      %p174 = scmp.ne.s32.totalorder %s162, %s163
      %p175 = scmp.eq.s32.totalorder %s33, 1
      %p176 = por %p174, %p175
      %p178 = scmp.ne.s32.totalorder %s163, %s177
      %p179 = scmp.eq.s32.totalorder %s33, 0
      %p180 = por %p178, %p179
      %s181 = ssub.s32 %s27, %s34
      %p182 = scmp.eq.s32.totalorder %s181, 0
      %s184 = sadd.s32 %s183, 1
      %s185 = scalar_select %p182, %s183, %s184
      %p188 = pneg %p182
      %p189 = scmp.eq.s32.totalorder %s27, 1
      %p190 = por %p188, %p189
      %p191 = scmp.ne.s32.totalorder %s183, %s186
      %p192 = scmp.eq.s32.totalorder %s27, 0
      %p193 = por %p191, %p192
      %p194 = scmp.ne.s32.totalorder %s183, %s186
      %p195 = scmp.eq.s32.totalorder %s32, 1
      %p196 = por %p194, %p195
      %p197 = scmp.ne.s32.totalorder %s186, %s187
      %p198 = scmp.eq.s32.totalorder %s32, 0
      %p199 = por %p197, %p198
      %p200 = scmp.ne.s32.totalorder %s186, %s187
      %p201 = scmp.eq.s32.totalorder %s33, 1
      %p202 = por %p200, %p201
      %p204 = scmp.ne.s32.totalorder %s187, %s203
      %p205 = scmp.eq.s32.totalorder %s33, 0
      %p206 = por %p204, %p205
      %s208 = sadd.s32 %s207, 1
      %p211 = scmp.eq.s32.totalorder %s27, 1
      %p212 = scmp.ne.s32.totalorder %s207, %s209
      %p213 = scmp.eq.s32.totalorder %s27, 0
      %p214 = por %p212, %p213
      %p215 = scmp.ne.s32.totalorder %s207, %s209
      %p216 = scmp.eq.s32.totalorder %s32, 1
      %p217 = por %p215, %p216
      %p218 = scmp.ne.s32.totalorder %s209, %s210
      %p219 = scmp.eq.s32.totalorder %s32, 0
      %p220 = por %p218, %p219
      %p221 = scmp.ne.s32.totalorder %s209, %s210
      %p222 = scmp.eq.s32.totalorder %s33, 1
      %p223 = por %p221, %p222
      %p225 = scmp.ne.s32.totalorder %s210, %s224
      %p226 = scmp.eq.s32.totalorder %s33, 0
      %p227 = por %p225, %p226
      %s229 = sadd.s32 %s228, 1
      %p232 = scmp.eq.s32.totalorder %s27, 1
      %p233 = scmp.ne.s32.totalorder %s228, %s230
      %p234 = scmp.eq.s32.totalorder %s27, 0
      %p235 = por %p233, %p234
      %p236 = scmp.ne.s32.totalorder %s228, %s230
      %p237 = scmp.eq.s32.totalorder %s32, 1
      %p238 = por %p236, %p237
      %p239 = scmp.ne.s32.totalorder %s230, %s231
      %p240 = scmp.eq.s32.totalorder %s32, 0
      %p241 = por %p239, %p240
      %p242 = scmp.ne.s32.totalorder %s230, %s231
      %p243 = scmp.eq.s32.totalorder %s33, 1
      %p244 = por %p242, %p243
      %p246 = scmp.ne.s32.totalorder %s231, %s245
      %p247 = scmp.eq.s32.totalorder %s33, 0
      %p248 = por %p246, %p247
      %s249 = ssub.s32 %s27, %s34
      %p250 = scmp.eq.s32.totalorder %s249, 0
      %s252 = sadd.s32 %s251, 1
      %s253 = scalar_select %p250, %s251, %s252
      %p256 = pneg %p250
      %p257 = scmp.eq.s32.totalorder %s27, 1
      %p258 = por %p256, %p257
      %p259 = scmp.ne.s32.totalorder %s251, %s254
      %p260 = scmp.eq.s32.totalorder %s27, 0
      %p261 = por %p259, %p260
      %p262 = scmp.ne.s32.totalorder %s251, %s254
      %p263 = scmp.eq.s32.totalorder %s32, 1
      %p264 = por %p262, %p263
      %p265 = scmp.ne.s32.totalorder %s254, %s255
      %p266 = scmp.eq.s32.totalorder %s32, 0
      %p267 = por %p265, %p266
      %p268 = scmp.ne.s32.totalorder %s254, %s255
      %p269 = scmp.eq.s32.totalorder %s33, 1
      %p270 = por %p268, %p269
      %p272 = scmp.ne.s32.totalorder %s255, %s271
      %p273 = scmp.eq.s32.totalorder %s33, 0
      %p274 = por %p272, %p273
      %p275 = scmp.le.s32.totalorder 1, %s27
      %p276 = scmp.lt.s32.totalorder %s27, 3
      %p277 = pnand %p275, %p276
      %p278 = pneg %p277
      // Predicated region
      $region9: #{tpu_custom_call.1} parent=5 // pred_check
        _
      $region10: #{tpu_custom_call.1} parent=5 // pred_check_branch
        %280 = sbr.rel (%p277) target = $region12
      $region11: #{tpu_custom_call.1} parent=5 // pred_region
        %s281 = ssub.s32 %s27, 1
        // Predicated region
        $region13: #{tpu_custom_call.1} parent=11 // pred_check
          %p282 = pneg %p152
        $region14: #{tpu_custom_call.1} parent=11 // pred_check_branch
          %284 = sbr.rel (%p282) target = $region16
        $region15: #{tpu_custom_call.1} parent=11 // pred_region
          %286 = vsyncadd [#allocation6], 0
          %s287 = sshll.u32 %s4, 4
          %s288 = int_to_ptr.hbm [resolvable:$true] %s287
          %s289 = sshll.u32 [#allocation7], 4
          %s290 = int_to_ptr.vmem [resolvable:$true] %s289
          %295 = dma.hbm_to_vmem [thread:$0]  %s288, 3072, %s290, [#allocation6], 64, 64, 4
        $region16: #{tpu_custom_call.1} parent=11 // pred_fallthru
          _
        // Predicated region
        $region17: #{tpu_custom_call.1} parent=11 // pred_check
          %p296 = pneg %p173
        $region18: #{tpu_custom_call.1} parent=11 // pred_check_branch
          %298 = sbr.rel (%p296) target = $region20
        $region19: #{tpu_custom_call.1} parent=11 // pred_region
          _
        $region20: #{tpu_custom_call.1} parent=11 // pred_fallthru
          _
        // Predicated region
        $region21: #{tpu_custom_call.1} parent=11 // pred_check
          %p299 = pneg %p220
        $region22: #{tpu_custom_call.1} parent=11 // pred_check_branch
          %301 = sbr.rel (%p299) target = $region24
        $region23: #{tpu_custom_call.1} parent=11 // pred_region
          %303 = vsyncadd [#allocation9], 0
          %s304 = sshll.u32 %s7, 4
          %s305 = int_to_ptr.hbm [resolvable:$true] %s304
          %s306 = sshll.u32 [#allocation10], 4
          %s307 = int_to_ptr.vmem [resolvable:$true] %s306
          %312 = dma.hbm_to_vmem [thread:$0]  %s305, 1024, %s307, [#allocation9], 64, 64, 4
        $region24: #{tpu_custom_call.1} parent=11 // pred_fallthru
          _
        // Predicated region
        $region25: #{tpu_custom_call.1} parent=11 // pred_check
          %p313 = pneg %p241
        $region26: #{tpu_custom_call.1} parent=11 // pred_check_branch
          %315 = sbr.rel (%p313) target = $region28
        $region27: #{tpu_custom_call.1} parent=11 // pred_region
          _
        $region28: #{tpu_custom_call.1} parent=11 // pred_fallthru
          _
      $region12: #{tpu_custom_call.1} parent=5 // pred_fallthru
        _
      %p316 = scmp.lt.s32.totalorder %s27, 2
      // Predicated region
      $region29: #{tpu_custom_call.1} parent=5 // pred_check
        %p317 = pneg %p316
      $region30: #{tpu_custom_call.1} parent=5 // pred_check_branch
        %319 = sbr.rel (%p317) target = $region32
      $region31: #{tpu_custom_call.1} parent=5 // pred_region
        // Predicated region
        $region33: #{tpu_custom_call.1} parent=31 // pred_check
          %p320 = pneg %p47
        $region34: #{tpu_custom_call.1} parent=31 // pred_check_branch
          %322 = sbr.rel (%p320) target = $region36
        $region35: #{tpu_custom_call.1} parent=31 // pred_region
          %s323 = sand.u32 %s37, 1
          %s324 = scalar_lea.sflag [#allocation3], %s323
          %s325 = sand.u32 %s37, 1
          %s326 = smul.addr %s325, 64
          %s327 = scalar_lea.vmem [#allocation2], %s326
          %329 = vsyncadd %s324, 0
          %s330 = smul.addr %s27, 16
          %s331 = smul.addr %s330, 4
          %s332 = scalar_lea.hbm %s0, %s331
          %s333 = sshll.u32 %s332, 4
          %s334 = int_to_ptr.hbm [resolvable:$true] %s333
          %s335 = sshll.u32 %s327, 4
          %s336 = int_to_ptr.vmem [resolvable:$true] %s335
          %341 = dma.hbm_to_vmem [thread:$0]  %s334, 1024, %s336, %s324, 64, 64, 4
        $region36: #{tpu_custom_call.1} parent=31 // pred_fallthru
          _
        // Predicated region
        $region37: #{tpu_custom_call.1} parent=31 // pred_check
          %p342 = pneg %p73
        $region38: #{tpu_custom_call.1} parent=31 // pred_check_branch
          %344 = sbr.rel (%p342) target = $region40
        $region39: #{tpu_custom_call.1} parent=31 // pred_region
          %p345 = scmp.lt.s32.totalorder %s27, 1
          %s346 = scalar_select %p345, %s27, 1
          %s347 = smul.addr %s346, 16
          %s348 = smul.addr %s347, 8
          %s349 = scalar_lea.vmem %s1, %s348
        $region40: #{tpu_custom_call.1} parent=31 // pred_fallthru
          _
        // Predicated region
        $region41: #{tpu_custom_call.1} parent=31 // pred_check
          %p350 = pneg %p99
        $region42: #{tpu_custom_call.1} parent=31 // pred_check_branch
          %352 = sbr.rel (%p350) target = $region44
        $region43: #{tpu_custom_call.1} parent=31 // pred_region
          %p353 = scmp.lt.s32.totalorder %s27, 1
          %s354 = scalar_select %p353, %s27, 1
          %s355 = smul.addr %s354, 16
          %s356 = smul.addr %s355, 8
          %s357 = scalar_lea.vmem %s2, %s356
        $region44: #{tpu_custom_call.1} parent=31 // pred_fallthru
          _
        // Predicated region
        $region45: #{tpu_custom_call.1} parent=31 // pred_check
          %p358 = pneg %p125
        $region46: #{tpu_custom_call.1} parent=31 // pred_check_branch
          %360 = sbr.rel (%p358) target = $region48
        $region47: #{tpu_custom_call.1} parent=31 // pred_region
          %s361 = sand.u32 %s27, 1
          %s362 = scalar_lea.sflag [#allocation6], %s361
          %s363 = sand.u32 %s115, 1
          %s364 = smul.addr %s363, 384
          %s365 = scalar_lea.vmem [#allocation5], %s364
          %367 = vsyncadd %s362, 0
          %s368 = smul.addr %s27, 48
          %s369 = smul.addr %s368, 8
          %s370 = scalar_lea.hbm %s3, %s369
          %s371 = sshll.u32 %s370, 4
          %s372 = int_to_ptr.hbm [resolvable:$true] %s371
          %s373 = sshll.u32 %s365, 4
          %s374 = int_to_ptr.vmem [resolvable:$true] %s373
          %379 = dma.hbm_to_vmem [thread:$0]  %s372, 6144, %s374, %s362, 128, 128, 8
        $region48: #{tpu_custom_call.1} parent=31 // pred_fallthru
          _
        // Predicated region
        $region49: #{tpu_custom_call.1} parent=31 // pred_check
          %p380 = pneg %p193
        $region50: #{tpu_custom_call.1} parent=31 // pred_check_branch
          %382 = sbr.rel (%p380) target = $region52
        $region51: #{tpu_custom_call.1} parent=31 // pred_region
          %s383 = sand.u32 %s27, 1
          %s384 = scalar_lea.sflag [#allocation9], %s383
          %s385 = sand.u32 %s183, 1
          %s386 = smul.addr %s385, 4
          %s387 = scalar_lea.vmem [#allocation8], %s386
          %389 = vsyncadd %s384, 0
          %s390 = smul.addr %s27, 4
          %s391 = scalar_lea.hbm %s6, %s390
          %s393 = sshll.u32 %s391, 4
          %s394 = int_to_ptr.hbm [resolvable:$true] %s393
          %s395 = sshll.u32 %s387, 4
          %s396 = int_to_ptr.vmem [resolvable:$true] %s395
          %398 = dma.hbm_to_vmem [thread:$0]  %s394, 64, %s396, %s384
        $region52: #{tpu_custom_call.1} parent=31 // pred_fallthru
          _
      $region32: #{tpu_custom_call.1} parent=5 // pred_fallthru
        _
      %p399 = scmp.le.s32.totalorder 1, %s27
      %p400 = scmp.lt.s32.totalorder %s27, 3
      %p401 = pnand %p399, %p400
      %p402 = pneg %p401
      // Predicated region
      $region53: #{tpu_custom_call.1} parent=5 // pred_check
        _
      $region54: #{tpu_custom_call.1} parent=5 // pred_check_branch
        %404 = sbr.rel (%p401) target = $region56
      $region55: #{tpu_custom_call.1} parent=5 // pred_region
        %s405 = ssub.s32 %s27, 1
        %s406 = sand.u32 %s40, 1
        %s407 = scalar_lea.sflag [#allocation3], %s406
        %s408 = sand.u32 %s40, 1
        %s409 = smul.addr %s408, 64
        %s410 = scalar_lea.vmem [#allocation2], %s409
        // Predicated region
        $region57: #{tpu_custom_call.1} parent=55 // pred_check
          %p411 = pneg %p53
        $region58: #{tpu_custom_call.1} parent=55 // pred_check_branch
          %413 = sbr.rel (%p411) target = $region60
        $region59: #{tpu_custom_call.1} parent=55 // pred_region
          %415 = dma.done %s407, 1024
        $region60: #{tpu_custom_call.1} parent=55 // pred_fallthru
          _
        %s416 = sand.u32 %s32, 1
        %s417 = scalar_lea.sflag [#allocation6], %s416
        %s418 = sand.u32 %s118, 1
        %s419 = smul.addr %s418, 384
        %s420 = scalar_lea.vmem [#allocation5], %s419
        // Predicated region
        $region61: #{tpu_custom_call.1} parent=55 // pred_check
          %p421 = pneg %p131
        $region62: #{tpu_custom_call.1} parent=55 // pred_check_branch
          %423 = sbr.rel (%p421) target = $region64
        $region63: #{tpu_custom_call.1} parent=55 // pred_region
          %425 = dma.done %s417, 6144
        $region64: #{tpu_custom_call.1} parent=55 // pred_fallthru
          _
        // Predicated region
        $region65: #{tpu_custom_call.1} parent=55 // pred_check
          %p426 = pneg %p152
        $region66: #{tpu_custom_call.1} parent=55 // pred_check_branch
          %428 = sbr.rel (%p426) target = $region68
        $region67: #{tpu_custom_call.1} parent=55 // pred_region
          %430 = dma.done [#allocation6], 3072
        $region68: #{tpu_custom_call.1} parent=55 // pred_fallthru
          _
        %s431 = sand.u32 %s32, 1
        %s432 = scalar_lea.sflag [#allocation9], %s431
        %s433 = sand.u32 %s186, 1
        %s434 = smul.addr %s433, 4
        %s435 = scalar_lea.vmem [#allocation8], %s434
        // Predicated region
        $region69: #{tpu_custom_call.1} parent=55 // pred_check
          %p436 = pneg %p199
        $region70: #{tpu_custom_call.1} parent=55 // pred_check_branch
          %438 = sbr.rel (%p436) target = $region72
        $region71: #{tpu_custom_call.1} parent=55 // pred_region
          %440 = dma.done %s432, 64
        $region72: #{tpu_custom_call.1} parent=55 // pred_fallthru
          _
        // Predicated region
        $region73: #{tpu_custom_call.1} parent=55 // pred_check
          %p441 = pneg %p220
        $region74: #{tpu_custom_call.1} parent=55 // pred_check_branch
          %443 = sbr.rel (%p441) target = $region76
        $region75: #{tpu_custom_call.1} parent=55 // pred_region
          %445 = dma.done [#allocation9], 1024
        $region76: #{tpu_custom_call.1} parent=55 // pred_fallthru
          _
        %s446 = sand.u32 %s40, 1
        %s447 = scalar_lea.sflag [#allocation3], %s446
        %s448 = sand.u32 %s40, 1
        %s449 = smul.addr %s448, 64
        %s450 = scalar_lea.vmem [#allocation2], %s449
        %p451 = pneg %p53
        %p452 = pneg %p50
        %p453 = scmp.lt.s32.totalorder %s32, 1
        %s454 = scalar_select %p453, %s32, 1
        %s455 = smul.addr %s454, 16
        %s456 = smul.addr %s455, 8
        %s457 = scalar_lea.vmem %s1, %s456
        %p458 = pneg %p79
        %p459 = pneg %p76
        %p460 = scmp.lt.s32.totalorder %s32, 1
        %s461 = scalar_select %p460, %s32, 1
        %s462 = smul.addr %s461, 16
        %s463 = smul.addr %s462, 8
        %s464 = scalar_lea.vmem %s2, %s463
        %p465 = pneg %p105
        %p466 = pneg %p102
        %s467 = sand.u32 %s32, 1
        %s468 = scalar_lea.sflag [#allocation6], %s467
        %s469 = sand.u32 %s118, 1
        %s470 = smul.addr %s469, 384
        %s471 = scalar_lea.vmem [#allocation5], %s470
        %p472 = pneg %p131
        %p473 = pneg %p128
        %p474 = pneg %p152
        %p475 = pneg %p149
        %p476 = pneg %p173
        %p477 = pneg %p170
        %s478 = sand.u32 %s32, 1
        %s479 = scalar_lea.sflag [#allocation9], %s478
        %s480 = sand.u32 %s186, 1
        %s481 = smul.addr %s480, 4
        %s482 = scalar_lea.vmem [#allocation8], %s481
        %p483 = pneg %p199
        %p484 = pneg %p196
        %p485 = pneg %p220
        %p486 = pneg %p217
        %p487 = pneg %p241
        %p488 = pneg %p238
        %p489 = pneg %p267
        %p490 = pneg %p264
        %s491 = sand.u32 %s254, 1
        %s492 = scalar_lea.sflag [#allocation4], %s491
        %s493 = sand.u32 %s254, 1
        %s494 = smul.addr %s493, 8
        %s495 = scalar_lea.vmem [#allocation11], %s494
        %p496 = scmp.lt.s32.totalorder %s32, 1
        %s497 = scalar_select %p496, %s32, 1
        %s498 = smul.addr %s497, 16
        %s499 = smul.addr %s498, 8
        %s500 = scalar_lea.vmem %s1, %s499
        %p501 = scmp.lt.s32.totalorder %s32, 1
        %s502 = scalar_select %p501, %s32, 1
        %s503 = smul.addr %s502, 16
        %s504 = smul.addr %s503, 8
        %s505 = scalar_lea.vmem %s2, %s504
        %v506 = vld [vmem:[%s410] sm:$0xf]
        %v507 = vld [vmem:[%s410 + $0x4] sm:$0xf]
        %v508 = vld [vmem:[%s410 + $0x8] sm:$0xf]
        %v509 = vld [vmem:[%s410 + $0xc] sm:$0xf]
        %v510 = vld [vmem:[%s410 + $0x10] sm:$0xf]
        %v511 = vld [vmem:[%s410 + $0x14] sm:$0xf]
        %v512 = vld [vmem:[%s410 + $0x18] sm:$0xf]
        %v513 = vld [vmem:[%s410 + $0x1c] sm:$0xf]
        %v514 = vld [vmem:[%s410 + $0x20] sm:$0xf]
        %v515 = vld [vmem:[%s410 + $0x24] sm:$0xf]
        %v516 = vld [vmem:[%s410 + $0x28] sm:$0xf]
        %v517 = vld [vmem:[%s410 + $0x2c] sm:$0xf]
        %v518 = vld [vmem:[%s410 + $0x30] sm:$0xf]
        %v519 = vld [vmem:[%s410 + $0x34] sm:$0xf]
        %v520 = vld [vmem:[%s410 + $0x38] sm:$0xf]
        %v521 = vld [vmem:[%s410 + $0x3c] sm:$0xf]
        %v522 = vld [vmem:[%s505] sm:$0xff]
        %v523 = vld [vmem:[%s505 + $0x8] sm:$0xff]
        %v524 = vld [vmem:[%s505 + $0x10] sm:$0xff]
        %v525 = vld [vmem:[%s505 + $0x18] sm:$0xff]
        %v526 = vld [vmem:[%s505 + $0x20] sm:$0xff]
        %v527 = vld [vmem:[%s505 + $0x28] sm:$0xff]
        %v528 = vld [vmem:[%s505 + $0x30] sm:$0xff]
        %v529 = vld [vmem:[%s505 + $0x38] sm:$0xff]
        %v530 = vld [vmem:[%s505 + $0x40] sm:$0xff]
        %v531 = vld [vmem:[%s505 + $0x48] sm:$0xff]
        %v532 = vld [vmem:[%s505 + $0x50] sm:$0xff]
        %v533 = vld [vmem:[%s505 + $0x58] sm:$0xff]
        %v534 = vld [vmem:[%s505 + $0x60] sm:$0xff]
        %v535 = vld [vmem:[%s505 + $0x68] sm:$0xff]
        %v536 = vld [vmem:[%s505 + $0x70] sm:$0xff]
        %v537 = vld [vmem:[%s505 + $0x78] sm:$0xff]
        %v538 = vld [vmem:[%s500] sm:$0xff]
        %v539 = vld [vmem:[%s500 + $0x8] sm:$0xff]
        %v540 = vld [vmem:[%s500 + $0x10] sm:$0xff]
        %v541 = vld [vmem:[%s500 + $0x18] sm:$0xff]
        %v542 = vld [vmem:[%s500 + $0x20] sm:$0xff]
        %v543 = vld [vmem:[%s500 + $0x28] sm:$0xff]
        %v544 = vld [vmem:[%s500 + $0x30] sm:$0xff]
        %v545 = vld [vmem:[%s500 + $0x38] sm:$0xff]
        %v546 = vld [vmem:[%s500 + $0x40] sm:$0xff]
        %v547 = vld [vmem:[%s500 + $0x48] sm:$0xff]
        %v548 = vld [vmem:[%s500 + $0x50] sm:$0xff]
        %v549 = vld [vmem:[%s500 + $0x58] sm:$0xff]
        %v550 = vld [vmem:[%s500 + $0x60] sm:$0xff]
        %v551 = vld [vmem:[%s500 + $0x68] sm:$0xff]
        %v552 = vld [vmem:[%s500 + $0x70] sm:$0xff]
        %v553 = vld [vmem:[%s500 + $0x78] sm:$0xff]
        %v554 = vpack.c.bf16 %v539, %v538
        %v555 = vpack.c.bf16 %v541, %v540
        %v556 = vpack.c.bf16 %v543, %v542
        %v557 = vpack.c.bf16 %v545, %v544
        %v558 = vpack.c.bf16 %v547, %v546
        %v559 = vpack.c.bf16 %v549, %v548
        %v560 = vpack.c.bf16 %v551, %v550
        %v561 = vpack.c.bf16 %v553, %v552
        %v578 = vunpack.c.l.b16 %v506
        %v579 = vunpack.c.l.b16 %v507
        %v580 = vunpack.c.l.b16 %v508
        %v581 = vunpack.c.l.b16 %v509
        %v582 = vunpack.c.l.b16 %v510
        %v583 = vunpack.c.l.b16 %v511
        %v584 = vunpack.c.l.b16 %v512
        %v585 = vunpack.c.l.b16 %v513
        %v586 = vunpack.c.l.b16 %v514
        %v587 = vunpack.c.l.b16 %v515
        %v588 = vunpack.c.l.b16 %v516
        %v589 = vunpack.c.l.b16 %v517
        %v590 = vunpack.c.l.b16 %v518
        %v591 = vunpack.c.l.b16 %v519
        %v592 = vunpack.c.l.b16 %v520
        %v593 = vunpack.c.l.b16 %v521
        %v594 = vpack.c.b16 %v579, %v578
        %v595 = vpack.c.b16 %v581, %v580
        %v596 = vpack.c.b16 %v583, %v582
        %v597 = vpack.c.b16 %v585, %v584
        %v598 = vpack.c.b16 %v587, %v586
        %v599 = vpack.c.b16 %v589, %v588
        %v600 = vpack.c.b16 %v591, %v590
        %v601 = vpack.c.b16 %v593, %v592
        %610 = vmatpush.bf16.msra.mxu0 %v561
        %611 = vmatpush.bf16.msra.mxu0 %v560
        %612 = vmatpush.bf16.msra.mxu0 %v559
        %613 = vmatpush.bf16.msra.mxu0 %v558
        %614 = vmatpush.bf16.msra.mxu0 %v557
        %615 = vmatpush.bf16.msra.mxu0 %v556
        %616 = vmatpush.bf16.msra.mxu0 %v555
        %617 = vmatpush.bf16.msra.mxu0 %v554
        %618 = vmatmul.bf16.gmra.mxu0 %v594
        %v619 = vpop.f32.mrf.mxu0
        %v620 = vadd.f32 0.0, %v619
        %v621 = vpop.f32.mrf.mxu0
        %v622 = vadd.f32 0.0, %v621
        %623 = vmatmul.bf16.gmra.mxu0 %v595
        %v624 = vpop.f32.mrf.mxu0
        %v625 = vadd.f32 0.0, %v624
        %v626 = vpop.f32.mrf.mxu0
        %v627 = vadd.f32 0.0, %v626
        %628 = vmatmul.bf16.gmra.mxu0 %v596
        %v629 = vpop.f32.mrf.mxu0
        %v630 = vadd.f32 0.0, %v629
        %v631 = vpop.f32.mrf.mxu0
        %v632 = vadd.f32 0.0, %v631
        %633 = vmatmul.bf16.gmra.mxu0 %v597
        %v634 = vpop.f32.mrf.mxu0
        %v635 = vadd.f32 0.0, %v634
        %v636 = vpop.f32.mrf.mxu0
        %v637 = vadd.f32 0.0, %v636
        %638 = vmatmul.bf16.gmra.mxu0 %v598
        %v639 = vpop.f32.mrf.mxu0
        %v640 = vadd.f32 0.0, %v639
        %v641 = vpop.f32.mrf.mxu0
        %v642 = vadd.f32 0.0, %v641
        %643 = vmatmul.bf16.gmra.mxu0 %v599
        %v644 = vpop.f32.mrf.mxu0
        %v645 = vadd.f32 0.0, %v644
        %v646 = vpop.f32.mrf.mxu0
        %v647 = vadd.f32 0.0, %v646
        %648 = vmatmul.bf16.gmra.mxu0 %v600
        %v649 = vpop.f32.mrf.mxu0
        %v650 = vadd.f32 0.0, %v649
        %v651 = vpop.f32.mrf.mxu0
        %v652 = vadd.f32 0.0, %v651
        %653 = vmatmul.bf16.gmra.mxu0 %v601
        %v654 = vpop.f32.mrf.mxu0
        %v655 = vadd.f32 0.0, %v654
        %v656 = vpop.f32.mrf.mxu0
        %v657 = vadd.f32 0.0, %v656
        %658 = vdwg.mxu0
        %660 = vset.pattern.permute.xlu0 0
        %661 = vperm.xlu0 %660, %v522
        %v662 = vpop.permute.xlu0 %661
        %665 = vset.pattern.permute.xlu0 0
        %666 = vperm.xlu0 %665, %v523
        %v667 = vpop.permute.xlu0 %666
        %670 = vset.pattern.permute.xlu0 0
        %671 = vperm.xlu0 %670, %v524
        %v672 = vpop.permute.xlu0 %671
        %675 = vset.pattern.permute.xlu0 0
        %676 = vperm.xlu0 %675, %v525
        %v677 = vpop.permute.xlu0 %676
        %680 = vset.pattern.permute.xlu0 0
        %681 = vperm.xlu0 %680, %v526
        %v682 = vpop.permute.xlu0 %681
        %685 = vset.pattern.permute.xlu0 0
        %686 = vperm.xlu0 %685, %v527
        %v687 = vpop.permute.xlu0 %686
        %690 = vset.pattern.permute.xlu0 0
        %691 = vperm.xlu0 %690, %v528
        %v692 = vpop.permute.xlu0 %691
        %695 = vset.pattern.permute.xlu0 0
        %696 = vperm.xlu0 %695, %v529
        %v697 = vpop.permute.xlu0 %696
        %700 = vset.pattern.permute.xlu0 0
        %701 = vperm.xlu0 %700, %v530
        %v702 = vpop.permute.xlu0 %701
        %705 = vset.pattern.permute.xlu0 0
        %706 = vperm.xlu0 %705, %v531
        %v707 = vpop.permute.xlu0 %706
        %710 = vset.pattern.permute.xlu0 0
        %711 = vperm.xlu0 %710, %v532
        %v712 = vpop.permute.xlu0 %711
        %715 = vset.pattern.permute.xlu0 0
        %716 = vperm.xlu0 %715, %v533
        %v717 = vpop.permute.xlu0 %716
        %720 = vset.pattern.permute.xlu0 0
        %721 = vperm.xlu0 %720, %v534
        %v722 = vpop.permute.xlu0 %721
        %725 = vset.pattern.permute.xlu0 0
        %726 = vperm.xlu0 %725, %v535
        %v727 = vpop.permute.xlu0 %726
        %730 = vset.pattern.permute.xlu0 0
        %731 = vperm.xlu0 %730, %v536
        %v732 = vpop.permute.xlu0 %731
        %735 = vset.pattern.permute.xlu0 0
        %736 = vperm.xlu0 %735, %v537
        %v737 = vpop.permute.xlu0 %736
        %v739 = vmul.f32 %v620, %v662
        %v740 = vmul.f32 %v622, %v667
        %v741 = vmul.f32 %v625, %v672
        %v742 = vmul.f32 %v627, %v677
        %v743 = vmul.f32 %v630, %v682
        %v744 = vmul.f32 %v632, %v687
        %v745 = vmul.f32 %v635, %v692
        %v746 = vmul.f32 %v637, %v697
        %v747 = vmul.f32 %v640, %v702
        %v748 = vmul.f32 %v642, %v707
        %v749 = vmul.f32 %v645, %v712
        %v750 = vmul.f32 %v647, %v717
        %v751 = vmul.f32 %v650, %v722
        %v752 = vmul.f32 %v652, %v727
        %v753 = vmul.f32 %v655, %v732
        %v754 = vmul.f32 %v657, %v737
        %v755 = vld [vmem:[%s420] sm:$0xff]
        %v756 = vld [vmem:[%s420 + $0x8] sm:$0xff]
        %v757 = vld [vmem:[%s420 + $0x10] sm:$0xff]
        %v758 = vld [vmem:[%s420 + $0x18] sm:$0xff]
        %v759 = vld [vmem:[%s420 + $0x20] sm:$0xff]
        %v760 = vld [vmem:[%s420 + $0x28] sm:$0xff]
        %v761 = vld [vmem:[%s420 + $0x30] sm:$0xff]
        %v762 = vld [vmem:[%s420 + $0x38] sm:$0xff]
        %v763 = vld [vmem:[%s420 + $0x40] sm:$0xff]
        %v764 = vld [vmem:[%s420 + $0x48] sm:$0xff]
        %v765 = vld [vmem:[%s420 + $0x50] sm:$0xff]
        %v766 = vld [vmem:[%s420 + $0x58] sm:$0xff]
        %v767 = vld [vmem:[%s420 + $0x60] sm:$0xff]
        %v768 = vld [vmem:[%s420 + $0x68] sm:$0xff]
        %v769 = vld [vmem:[%s420 + $0x70] sm:$0xff]
        %v770 = vld [vmem:[%s420 + $0x78] sm:$0xff]
        %v771 = vadd.f32 %v739, %v755
        %v772 = vadd.f32 %v740, %v756
        %v773 = vadd.f32 %v741, %v757
        %v774 = vadd.f32 %v742, %v758
        %v775 = vadd.f32 %v743, %v759
        %v776 = vadd.f32 %v744, %v760
        %v777 = vadd.f32 %v745, %v761
        %v778 = vadd.f32 %v746, %v762
        %v779 = vadd.f32 %v747, %v763
        %v780 = vadd.f32 %v748, %v764
        %v781 = vadd.f32 %v749, %v765
        %v782 = vadd.f32 %v750, %v766
        %v783 = vadd.f32 %v751, %v767
        %v784 = vadd.f32 %v752, %v768
        %v785 = vadd.f32 %v753, %v769
        %v786 = vadd.f32 %v754, %v770
        %v787 = vpack.c.bf16 %v772, %v771
        %v788 = vpack.c.bf16 %v774, %v773
        %v789 = vpack.c.bf16 %v776, %v775
        %v790 = vpack.c.bf16 %v778, %v777
        %v791 = vpack.c.bf16 %v780, %v779
        %v792 = vpack.c.bf16 %v782, %v781
        %v793 = vpack.c.bf16 %v784, %v783
        %v794 = vpack.c.bf16 %v786, %v785
        %v795 = vld [vmem:[#allocation7] sm:$0xf]
        %v796 = vld [vmem:[#allocation7 + $0x4] sm:$0xf]
        %v797 = vld [vmem:[#allocation7 + $0x8] sm:$0xf]
        %v798 = vld [vmem:[#allocation7 + $0xc] sm:$0xf]
        %v799 = vld [vmem:[#allocation7 + $0x10] sm:$0xf]
        %v800 = vld [vmem:[#allocation7 + $0x14] sm:$0xf]
        %v801 = vld [vmem:[#allocation7 + $0x18] sm:$0xf]
        %v802 = vld [vmem:[#allocation7 + $0x1c] sm:$0xf]
        %v803 = vld [vmem:[#allocation7 + $0x20] sm:$0xf]
        %v804 = vld [vmem:[#allocation7 + $0x24] sm:$0xf]
        %v805 = vld [vmem:[#allocation7 + $0x28] sm:$0xf]
        %v806 = vld [vmem:[#allocation7 + $0x2c] sm:$0xf]
        %v807 = vld [vmem:[#allocation7 + $0x30] sm:$0xf]
        %v808 = vld [vmem:[#allocation7 + $0x34] sm:$0xf]
        %v809 = vld [vmem:[#allocation7 + $0x38] sm:$0xf]
        %v810 = vld [vmem:[#allocation7 + $0x3c] sm:$0xf]
        %v811 = vld [vmem:[%s5] sm:$0x1]
        %v813 = vperm.slane %v811, 0
        %v831 = vunpack.c.l.b16 %v795
        %v832 = vunpack.c.l.b16 %v796
        %v833 = vunpack.c.l.b16 %v797
        %v834 = vunpack.c.l.b16 %v798
        %v835 = vunpack.c.l.b16 %v799
        %v836 = vunpack.c.l.b16 %v800
        %v837 = vunpack.c.l.b16 %v801
        %v838 = vunpack.c.l.b16 %v802
        %v839 = vunpack.c.l.b16 %v803
        %v840 = vunpack.c.l.b16 %v804
        %v841 = vunpack.c.l.b16 %v805
        %v842 = vunpack.c.l.b16 %v806
        %v843 = vunpack.c.l.b16 %v807
        %v844 = vunpack.c.l.b16 %v808
        %v845 = vunpack.c.l.b16 %v809
        %v846 = vunpack.c.l.b16 %v810
        %v847 = vpack.c.b16 %v832, %v831
        %v848 = vpack.c.b16 %v834, %v833
        %v849 = vpack.c.b16 %v836, %v835
        %v850 = vpack.c.b16 %v838, %v837
        %v851 = vpack.c.b16 %v840, %v839
        %v852 = vpack.c.b16 %v842, %v841
        %v853 = vpack.c.b16 %v844, %v843
        %v854 = vpack.c.b16 %v846, %v845
        %863 = vmatpush.bf16.msra.mxu0 %v854
        %864 = vmatpush.bf16.msra.mxu0 %v853
        %865 = vmatpush.bf16.msra.mxu0 %v852
        %866 = vmatpush.bf16.msra.mxu0 %v851
        %867 = vmatpush.bf16.msra.mxu0 %v850
        %868 = vmatpush.bf16.msra.mxu0 %v849
        %869 = vmatpush.bf16.msra.mxu0 %v848
        %870 = vmatpush.bf16.msra.mxu0 %v847
        %871 = vmatmul.bf16.gmra.mxu0 %v787
        %v872 = vpop.f32.mrf.mxu0
        %v873 = vadd.f32 %v813, %v872
        %v874 = vpop.f32.mrf.mxu0
        %v875 = vadd.f32 %v813, %v874
        %876 = vmatmul.bf16.gmra.mxu0 %v788
        %v877 = vpop.f32.mrf.mxu0
        %v878 = vadd.f32 %v813, %v877
        %v879 = vpop.f32.mrf.mxu0
        %v880 = vadd.f32 %v813, %v879
        %881 = vmatmul.bf16.gmra.mxu0 %v789
        %v882 = vpop.f32.mrf.mxu0
        %v883 = vadd.f32 %v813, %v882
        %v884 = vpop.f32.mrf.mxu0
        %v885 = vadd.f32 %v813, %v884
        %886 = vmatmul.bf16.gmra.mxu0 %v790
        %v887 = vpop.f32.mrf.mxu0
        %v888 = vadd.f32 %v813, %v887
        %v889 = vpop.f32.mrf.mxu0
        %v890 = vadd.f32 %v813, %v889
        %891 = vmatmul.bf16.gmra.mxu0 %v791
        %v892 = vpop.f32.mrf.mxu0
        %v893 = vadd.f32 %v813, %v892
        %v894 = vpop.f32.mrf.mxu0
        %v895 = vadd.f32 %v813, %v894
        %896 = vmatmul.bf16.gmra.mxu0 %v792
        %v897 = vpop.f32.mrf.mxu0
        %v898 = vadd.f32 %v813, %v897
        %v899 = vpop.f32.mrf.mxu0
        %v900 = vadd.f32 %v813, %v899
        %901 = vmatmul.bf16.gmra.mxu0 %v793
        %v902 = vpop.f32.mrf.mxu0
        %v903 = vadd.f32 %v813, %v902
        %v904 = vpop.f32.mrf.mxu0
        %v905 = vadd.f32 %v813, %v904
        %906 = vmatmul.bf16.gmra.mxu0 %v794
        %v907 = vpop.f32.mrf.mxu0
        %v908 = vadd.f32 %v813, %v907
        %v909 = vpop.f32.mrf.mxu0
        %v910 = vadd.f32 %v813, %v909
        %911 = vdwg.mxu0
        %v912 = vadd.f32 %v873, %v875
        %v913 = vadd.f32 %v912, %v878
        %v914 = vadd.f32 %v913, %v880
        %v915 = vadd.f32 %v914, %v883
        %v916 = vadd.f32 %v915, %v885
        %v917 = vadd.f32 %v916, %v888
        %v918 = vadd.f32 %v917, %v890
        %v919 = vadd.f32 %v918, %v893
        %v920 = vadd.f32 %v919, %v895
        %v921 = vadd.f32 %v920, %v898
        %v922 = vadd.f32 %v921, %v900
        %v923 = vadd.f32 %v922, %v903
        %v924 = vadd.f32 %v923, %v905
        %v925 = vadd.f32 %v924, %v908
        %v926 = vadd.f32 %v925, %v910
        %v927 = vrot.slane %v926, 4
        %v928 = vadd.f32 %v926, %v927
        %v929 = vrot.slane %v928, 2
        %v930 = vadd.f32 %v928, %v929
        %v931 = vrot.slane %v930, 1
        %v932 = vadd.f32 %v930, %v931
        %v933 = vmul.f32 %v873, %v873
        %v934 = vmul.f32 %v875, %v875
        %v935 = vmul.f32 %v878, %v878
        %v936 = vmul.f32 %v880, %v880
        %v937 = vmul.f32 %v883, %v883
        %v938 = vmul.f32 %v885, %v885
        %v939 = vmul.f32 %v888, %v888
        %v940 = vmul.f32 %v890, %v890
        %v941 = vmul.f32 %v893, %v893
        %v942 = vmul.f32 %v895, %v895
        %v943 = vmul.f32 %v898, %v898
        %v944 = vmul.f32 %v900, %v900
        %v945 = vmul.f32 %v903, %v903
        %v946 = vmul.f32 %v905, %v905
        %v947 = vmul.f32 %v908, %v908
        %v948 = vmul.f32 %v910, %v910
        %v949 = vadd.f32 %v933, %v934
        %v950 = vadd.f32 %v949, %v935
        %v951 = vadd.f32 %v950, %v936
        %v952 = vadd.f32 %v951, %v937
        %v953 = vadd.f32 %v952, %v938
        %v954 = vadd.f32 %v953, %v939
        %v955 = vadd.f32 %v954, %v940
        %v956 = vadd.f32 %v955, %v941
        %v957 = vadd.f32 %v956, %v942
        %v958 = vadd.f32 %v957, %v943
        %v959 = vadd.f32 %v958, %v944
        %v960 = vadd.f32 %v959, %v945
        %v961 = vadd.f32 %v960, %v946
        %v962 = vadd.f32 %v961, %v947
        %v963 = vadd.f32 %v962, %v948
        %v964 = vrot.slane %v963, 4
        %v965 = vadd.f32 %v963, %v964
        %v966 = vrot.slane %v965, 2
        %v967 = vadd.f32 %v965, %v966
        %v968 = vrot.slane %v967, 1
        %v969 = vadd.f32 %v967, %v968
        %v970 = vmul.f32 %v932, 0.0078125
        %v971 = vmul.f32 %v969, 0.0078125
        %v972 = vmul.f32 %v970, %v970
        %v973 = vsub.f32 %v971, %v972
        %v974 = vmax.f32 %v973, 0.0
        %v975 = vsub.f32 %v873, %v970
        %v976 = vsub.f32 %v875, %v970
        %v977 = vsub.f32 %v878, %v970
        %v978 = vsub.f32 %v880, %v970
        %v979 = vsub.f32 %v883, %v970
        %v980 = vsub.f32 %v885, %v970
        %v981 = vsub.f32 %v888, %v970
        %v982 = vsub.f32 %v890, %v970
        %v983 = vsub.f32 %v893, %v970
        %v984 = vsub.f32 %v895, %v970
        %v985 = vsub.f32 %v898, %v970
        %v986 = vsub.f32 %v900, %v970
        %v987 = vsub.f32 %v903, %v970
        %v988 = vsub.f32 %v905, %v970
        %v989 = vsub.f32 %v908, %v970
        %v990 = vsub.f32 %v910, %v970
        %v991 = vadd.f32 %v974, 1e-05
        %v992 = vrsqrt.pop %v991
        %v993 = vmul.f32 %v992, %v991
        %v994 = vmul.f32 %v993, %v992
        %v995 = vmul.f32 0.5, %v994
        %v996 = vsub.f32 1.5, %v995
        %v997 = vmul.f32 %v992, %v996
        %vm998 = vweird.f32 %v991
        %vm999 = vweird.f32 %v992
        %vm1000 = vmor %vm998, %vm999
        %v1001 = vsel %vm1000, %v992, %v997
        %v1002 = vmul.f32 %v975, %v1001
        %v1003 = vmul.f32 %v976, %v1001
        %v1004 = vmul.f32 %v977, %v1001
        %v1005 = vmul.f32 %v978, %v1001
        %v1006 = vmul.f32 %v979, %v1001
        %v1007 = vmul.f32 %v980, %v1001
        %v1008 = vmul.f32 %v981, %v1001
        %v1009 = vmul.f32 %v982, %v1001
        %v1010 = vmul.f32 %v983, %v1001
        %v1011 = vmul.f32 %v984, %v1001
        %v1012 = vmul.f32 %v985, %v1001
        %v1013 = vmul.f32 %v986, %v1001
        %v1014 = vmul.f32 %v987, %v1001
        %v1015 = vmul.f32 %v988, %v1001
        %v1016 = vmul.f32 %v989, %v1001
        %v1017 = vmul.f32 %v990, %v1001
        %v1018 = vmax.f32 %v1002, 0.0
        %v1019 = vmax.f32 %v1003, 0.0
        %v1020 = vmax.f32 %v1004, 0.0
        %v1021 = vmax.f32 %v1005, 0.0
        %v1022 = vmax.f32 %v1006, 0.0
        %v1023 = vmax.f32 %v1007, 0.0
        %v1024 = vmax.f32 %v1008, 0.0
        %v1025 = vmax.f32 %v1009, 0.0
        %v1026 = vmax.f32 %v1010, 0.0
        %v1027 = vmax.f32 %v1011, 0.0
        %v1028 = vmax.f32 %v1012, 0.0
        %v1029 = vmax.f32 %v1013, 0.0
        %v1030 = vmax.f32 %v1014, 0.0
        %v1031 = vmax.f32 %v1015, 0.0
        %v1032 = vmax.f32 %v1016, 0.0
        %v1033 = vmax.f32 %v1017, 0.0
        %v1034 = vpack.c.bf16 %v1019, %v1018
        %v1035 = vpack.c.bf16 %v1021, %v1020
        %v1036 = vpack.c.bf16 %v1023, %v1022
        %v1037 = vpack.c.bf16 %v1025, %v1024
        %v1038 = vpack.c.bf16 %v1027, %v1026
        %v1039 = vpack.c.bf16 %v1029, %v1028
        %v1040 = vpack.c.bf16 %v1031, %v1030
        %v1041 = vpack.c.bf16 %v1033, %v1032
        %1042 = vmatpush.bf16.msra.mxu0 %v1041
        %1043 = vmatpush.bf16.msra.mxu0 %v1040
        %1044 = vmatpush.bf16.msra.mxu0 %v1039
        %1045 = vmatpush.bf16.msra.mxu0 %v1038
        %1046 = vmatpush.bf16.msra.mxu0 %v1037
        %1047 = vmatpush.bf16.msra.mxu0 %v1036
        %1048 = vmatpush.bf16.msra.mxu0 %v1035
        %1049 = vmatpush.bf16.msra.mxu0 %v1034
        %1050 = vmatmul.bf16.gmra.mxu0 %v594
        %v1051 = vpop.f32.mrf.mxu0
        %v1052 = vadd.f32 0.0, %v1051
        %v1053 = vpop.f32.mrf.mxu0
        %v1054 = vadd.f32 0.0, %v1053
        %1055 = vmatmul.bf16.gmra.mxu0 %v595
        %v1056 = vpop.f32.mrf.mxu0
        %v1057 = vadd.f32 0.0, %v1056
        %v1058 = vpop.f32.mrf.mxu0
        %v1059 = vadd.f32 0.0, %v1058
        %1060 = vmatmul.bf16.gmra.mxu0 %v596
        %v1061 = vpop.f32.mrf.mxu0
        %v1062 = vadd.f32 0.0, %v1061
        %v1063 = vpop.f32.mrf.mxu0
        %v1064 = vadd.f32 0.0, %v1063
        %1065 = vmatmul.bf16.gmra.mxu0 %v597
        %v1066 = vpop.f32.mrf.mxu0
        %v1067 = vadd.f32 0.0, %v1066
        %v1068 = vpop.f32.mrf.mxu0
        %v1069 = vadd.f32 0.0, %v1068
        %1070 = vmatmul.bf16.gmra.mxu0 %v598
        %v1071 = vpop.f32.mrf.mxu0
        %v1072 = vadd.f32 0.0, %v1071
        %v1073 = vpop.f32.mrf.mxu0
        %v1074 = vadd.f32 0.0, %v1073
        %1075 = vmatmul.bf16.gmra.mxu0 %v599
        %v1076 = vpop.f32.mrf.mxu0
        %v1077 = vadd.f32 0.0, %v1076
        %v1078 = vpop.f32.mrf.mxu0
        %v1079 = vadd.f32 0.0, %v1078
        %1080 = vmatmul.bf16.gmra.mxu0 %v600
        %v1081 = vpop.f32.mrf.mxu0
        %v1082 = vadd.f32 0.0, %v1081
        %v1083 = vpop.f32.mrf.mxu0
        %v1084 = vadd.f32 0.0, %v1083
        %1085 = vmatmul.bf16.gmra.mxu0 %v601
        %v1086 = vpop.f32.mrf.mxu0
        %v1087 = vadd.f32 0.0, %v1086
        %v1088 = vpop.f32.mrf.mxu0
        %v1089 = vadd.f32 0.0, %v1088
        %1090 = vdwg.mxu0
        %v1091 = vmul.f32 %v1052, %v662
        %v1092 = vmul.f32 %v1054, %v667
        %v1093 = vmul.f32 %v1057, %v672
        %v1094 = vmul.f32 %v1059, %v677
        %v1095 = vmul.f32 %v1062, %v682
        %v1096 = vmul.f32 %v1064, %v687
        %v1097 = vmul.f32 %v1067, %v692
        %v1098 = vmul.f32 %v1069, %v697
        %v1099 = vmul.f32 %v1072, %v702
        %v1100 = vmul.f32 %v1074, %v707
        %v1101 = vmul.f32 %v1077, %v712
        %v1102 = vmul.f32 %v1079, %v717
        %v1103 = vmul.f32 %v1082, %v722
        %v1104 = vmul.f32 %v1084, %v727
        %v1105 = vmul.f32 %v1087, %v732
        %v1106 = vmul.f32 %v1089, %v737
        %s1107 = scalar_lea.vmem %s420, 128 [#allocation5]
        %v1108 = vld [vmem:[%s1107] sm:$0xff]
        %v1109 = vld [vmem:[%s1107 + $0x8] sm:$0xff]
        %v1110 = vld [vmem:[%s1107 + $0x10] sm:$0xff]
        %v1111 = vld [vmem:[%s1107 + $0x18] sm:$0xff]
        %v1112 = vld [vmem:[%s1107 + $0x20] sm:$0xff]
        %v1113 = vld [vmem:[%s1107 + $0x28] sm:$0xff]
        %v1114 = vld [vmem:[%s1107 + $0x30] sm:$0xff]
        %v1115 = vld [vmem:[%s1107 + $0x38] sm:$0xff]
        %v1116 = vld [vmem:[%s1107 + $0x40] sm:$0xff]
        %v1117 = vld [vmem:[%s1107 + $0x48] sm:$0xff]
        %v1118 = vld [vmem:[%s1107 + $0x50] sm:$0xff]
        %v1119 = vld [vmem:[%s1107 + $0x58] sm:$0xff]
        %v1120 = vld [vmem:[%s1107 + $0x60] sm:$0xff]
        %v1121 = vld [vmem:[%s1107 + $0x68] sm:$0xff]
        %v1122 = vld [vmem:[%s1107 + $0x70] sm:$0xff]
        %v1123 = vld [vmem:[%s1107 + $0x78] sm:$0xff]
        %v1124 = vadd.f32 %v1091, %v1108
        %v1125 = vadd.f32 %v1092, %v1109
        %v1126 = vadd.f32 %v1093, %v1110
        %v1127 = vadd.f32 %v1094, %v1111
        %v1128 = vadd.f32 %v1095, %v1112
        %v1129 = vadd.f32 %v1096, %v1113
        %v1130 = vadd.f32 %v1097, %v1114
        %v1131 = vadd.f32 %v1098, %v1115
        %v1132 = vadd.f32 %v1099, %v1116
        %v1133 = vadd.f32 %v1100, %v1117
        %v1134 = vadd.f32 %v1101, %v1118
        %v1135 = vadd.f32 %v1102, %v1119
        %v1136 = vadd.f32 %v1103, %v1120
        %v1137 = vadd.f32 %v1104, %v1121
        %v1138 = vadd.f32 %v1105, %v1122
        %v1139 = vadd.f32 %v1106, %v1123
        %v1140 = vpack.c.bf16 %v1125, %v1124
        %v1141 = vpack.c.bf16 %v1127, %v1126
        %v1142 = vpack.c.bf16 %v1129, %v1128
        %v1143 = vpack.c.bf16 %v1131, %v1130
        %v1144 = vpack.c.bf16 %v1133, %v1132
        %v1145 = vpack.c.bf16 %v1135, %v1134
        %v1146 = vpack.c.bf16 %v1137, %v1136
        %v1147 = vpack.c.bf16 %v1139, %v1138
        %s1148 = scalar_lea.vmem [#allocation7], 64
        %v1149 = vld [vmem:[%s1148] sm:$0xf]
        %v1150 = vld [vmem:[%s1148 + $0x4] sm:$0xf]
        %v1151 = vld [vmem:[%s1148 + $0x8] sm:$0xf]
        %v1152 = vld [vmem:[%s1148 + $0xc] sm:$0xf]
        %v1153 = vld [vmem:[%s1148 + $0x10] sm:$0xf]
        %v1154 = vld [vmem:[%s1148 + $0x14] sm:$0xf]
        %v1155 = vld [vmem:[%s1148 + $0x18] sm:$0xf]
        %v1156 = vld [vmem:[%s1148 + $0x1c] sm:$0xf]
        %v1157 = vld [vmem:[%s1148 + $0x20] sm:$0xf]
        %v1158 = vld [vmem:[%s1148 + $0x24] sm:$0xf]
        %v1159 = vld [vmem:[%s1148 + $0x28] sm:$0xf]
        %v1160 = vld [vmem:[%s1148 + $0x2c] sm:$0xf]
        %v1161 = vld [vmem:[%s1148 + $0x30] sm:$0xf]
        %v1162 = vld [vmem:[%s1148 + $0x34] sm:$0xf]
        %v1163 = vld [vmem:[%s1148 + $0x38] sm:$0xf]
        %v1164 = vld [vmem:[%s1148 + $0x3c] sm:$0xf]
        %s1165 = scalar_lea.vmem %s5, 1
        %v1166 = vld [vmem:[%s1165] sm:$0x1]
        %v1168 = vperm.slane %v1166, 0
        %v1186 = vunpack.c.l.b16 %v1149
        %v1187 = vunpack.c.l.b16 %v1150
        %v1188 = vunpack.c.l.b16 %v1151
        %v1189 = vunpack.c.l.b16 %v1152
        %v1190 = vunpack.c.l.b16 %v1153
        %v1191 = vunpack.c.l.b16 %v1154
        %v1192 = vunpack.c.l.b16 %v1155
        %v1193 = vunpack.c.l.b16 %v1156
        %v1194 = vunpack.c.l.b16 %v1157
        %v1195 = vunpack.c.l.b16 %v1158
        %v1196 = vunpack.c.l.b16 %v1159
        %v1197 = vunpack.c.l.b16 %v1160
        %v1198 = vunpack.c.l.b16 %v1161
        %v1199 = vunpack.c.l.b16 %v1162
        %v1200 = vunpack.c.l.b16 %v1163
        %v1201 = vunpack.c.l.b16 %v1164
        %v1202 = vpack.c.b16 %v1187, %v1186
        %v1203 = vpack.c.b16 %v1189, %v1188
        %v1204 = vpack.c.b16 %v1191, %v1190
        %v1205 = vpack.c.b16 %v1193, %v1192
        %v1206 = vpack.c.b16 %v1195, %v1194
        %v1207 = vpack.c.b16 %v1197, %v1196
        %v1208 = vpack.c.b16 %v1199, %v1198
        %v1209 = vpack.c.b16 %v1201, %v1200
        %1218 = vmatpush.bf16.msra.mxu0 %v1209
        %1219 = vmatpush.bf16.msra.mxu0 %v1208
        %1220 = vmatpush.bf16.msra.mxu0 %v1207
        %1221 = vmatpush.bf16.msra.mxu0 %v1206
        %1222 = vmatpush.bf16.msra.mxu0 %v1205
        %1223 = vmatpush.bf16.msra.mxu0 %v1204
        %1224 = vmatpush.bf16.msra.mxu0 %v1203
        %1225 = vmatpush.bf16.msra.mxu0 %v1202
        %1226 = vmatmul.bf16.gmra.mxu0 %v1140
        %v1227 = vpop.f32.mrf.mxu0
        %v1228 = vadd.f32 %v1168, %v1227
        %v1229 = vpop.f32.mrf.mxu0
        %v1230 = vadd.f32 %v1168, %v1229
        %1231 = vmatmul.bf16.gmra.mxu0 %v1141
        %v1232 = vpop.f32.mrf.mxu0
        %v1233 = vadd.f32 %v1168, %v1232
        %v1234 = vpop.f32.mrf.mxu0
        %v1235 = vadd.f32 %v1168, %v1234
        %1236 = vmatmul.bf16.gmra.mxu0 %v1142
        %v1237 = vpop.f32.mrf.mxu0
        %v1238 = vadd.f32 %v1168, %v1237
        %v1239 = vpop.f32.mrf.mxu0
        %v1240 = vadd.f32 %v1168, %v1239
        %1241 = vmatmul.bf16.gmra.mxu0 %v1143
        %v1242 = vpop.f32.mrf.mxu0
        %v1243 = vadd.f32 %v1168, %v1242
        %v1244 = vpop.f32.mrf.mxu0
        %v1245 = vadd.f32 %v1168, %v1244
        %1246 = vmatmul.bf16.gmra.mxu0 %v1144
        %v1247 = vpop.f32.mrf.mxu0
        %v1248 = vadd.f32 %v1168, %v1247
        %v1249 = vpop.f32.mrf.mxu0
        %v1250 = vadd.f32 %v1168, %v1249
        %1251 = vmatmul.bf16.gmra.mxu0 %v1145
        %v1252 = vpop.f32.mrf.mxu0
        %v1253 = vadd.f32 %v1168, %v1252
        %v1254 = vpop.f32.mrf.mxu0
        %v1255 = vadd.f32 %v1168, %v1254
        %1256 = vmatmul.bf16.gmra.mxu0 %v1146
        %v1257 = vpop.f32.mrf.mxu0
        %v1258 = vadd.f32 %v1168, %v1257
        %v1259 = vpop.f32.mrf.mxu0
        %v1260 = vadd.f32 %v1168, %v1259
        %1261 = vmatmul.bf16.gmra.mxu0 %v1147
        %v1262 = vpop.f32.mrf.mxu0
        %v1263 = vadd.f32 %v1168, %v1262
        %v1264 = vpop.f32.mrf.mxu0
        %v1265 = vadd.f32 %v1168, %v1264
        %1266 = vdwg.mxu0
        %v1267 = vadd.f32 %v1228, %v1230
        %v1268 = vadd.f32 %v1267, %v1233
        %v1269 = vadd.f32 %v1268, %v1235
        %v1270 = vadd.f32 %v1269, %v1238
        %v1271 = vadd.f32 %v1270, %v1240
        %v1272 = vadd.f32 %v1271, %v1243
        %v1273 = vadd.f32 %v1272, %v1245
        %v1274 = vadd.f32 %v1273, %v1248
        %v1275 = vadd.f32 %v1274, %v1250
        %v1276 = vadd.f32 %v1275, %v1253
        %v1277 = vadd.f32 %v1276, %v1255
        %v1278 = vadd.f32 %v1277, %v1258
        %v1279 = vadd.f32 %v1278, %v1260
        %v1280 = vadd.f32 %v1279, %v1263
        %v1281 = vadd.f32 %v1280, %v1265
        %v1282 = vrot.slane %v1281, 4
        %v1283 = vadd.f32 %v1281, %v1282
        %v1284 = vrot.slane %v1283, 2
        %v1285 = vadd.f32 %v1283, %v1284
        %v1286 = vrot.slane %v1285, 1
        %v1287 = vadd.f32 %v1285, %v1286
        %v1288 = vmul.f32 %v1228, %v1228
        %v1289 = vmul.f32 %v1230, %v1230
        %v1290 = vmul.f32 %v1233, %v1233
        %v1291 = vmul.f32 %v1235, %v1235
        %v1292 = vmul.f32 %v1238, %v1238
        %v1293 = vmul.f32 %v1240, %v1240
        %v1294 = vmul.f32 %v1243, %v1243
        %v1295 = vmul.f32 %v1245, %v1245
        %v1296 = vmul.f32 %v1248, %v1248
        %v1297 = vmul.f32 %v1250, %v1250
        %v1298 = vmul.f32 %v1253, %v1253
        %v1299 = vmul.f32 %v1255, %v1255
        %v1300 = vmul.f32 %v1258, %v1258
        %v1301 = vmul.f32 %v1260, %v1260
        %v1302 = vmul.f32 %v1263, %v1263
        %v1303 = vmul.f32 %v1265, %v1265
        %v1304 = vadd.f32 %v1288, %v1289
        %v1305 = vadd.f32 %v1304, %v1290
        %v1306 = vadd.f32 %v1305, %v1291
        %v1307 = vadd.f32 %v1306, %v1292
        %v1308 = vadd.f32 %v1307, %v1293
        %v1309 = vadd.f32 %v1308, %v1294
        %v1310 = vadd.f32 %v1309, %v1295
        %v1311 = vadd.f32 %v1310, %v1296
        %v1312 = vadd.f32 %v1311, %v1297
        %v1313 = vadd.f32 %v1312, %v1298
        %v1314 = vadd.f32 %v1313, %v1299
        %v1315 = vadd.f32 %v1314, %v1300
        %v1316 = vadd.f32 %v1315, %v1301
        %v1317 = vadd.f32 %v1316, %v1302
        %v1318 = vadd.f32 %v1317, %v1303
        %v1319 = vrot.slane %v1318, 4
        %v1320 = vadd.f32 %v1318, %v1319
        %v1321 = vrot.slane %v1320, 2
        %v1322 = vadd.f32 %v1320, %v1321
        %v1323 = vrot.slane %v1322, 1
        %v1324 = vadd.f32 %v1322, %v1323
        %v1325 = vmul.f32 %v1287, 0.0078125
        %v1326 = vmul.f32 %v1324, 0.0078125
        %v1327 = vmul.f32 %v1325, %v1325
        %v1328 = vsub.f32 %v1326, %v1327
        %v1329 = vmax.f32 %v1328, 0.0
        %v1330 = vsub.f32 %v1228, %v1325
        %v1331 = vsub.f32 %v1230, %v1325
        %v1332 = vsub.f32 %v1233, %v1325
        %v1333 = vsub.f32 %v1235, %v1325
        %v1334 = vsub.f32 %v1238, %v1325
        %v1335 = vsub.f32 %v1240, %v1325
        %v1336 = vsub.f32 %v1243, %v1325
        %v1337 = vsub.f32 %v1245, %v1325
        %v1338 = vsub.f32 %v1248, %v1325
        %v1339 = vsub.f32 %v1250, %v1325
        %v1340 = vsub.f32 %v1253, %v1325
        %v1341 = vsub.f32 %v1255, %v1325
        %v1342 = vsub.f32 %v1258, %v1325
        %v1343 = vsub.f32 %v1260, %v1325
        %v1344 = vsub.f32 %v1263, %v1325
        %v1345 = vsub.f32 %v1265, %v1325
        %v1346 = vadd.f32 %v1329, 1e-05
        %v1347 = vrsqrt.pop %v1346
        %v1348 = vmul.f32 %v1347, %v1346
        %v1349 = vmul.f32 %v1348, %v1347
        %v1350 = vmul.f32 0.5, %v1349
        %v1351 = vsub.f32 1.5, %v1350
        %v1352 = vmul.f32 %v1347, %v1351
        %vm1353 = vweird.f32 %v1346
        %vm1354 = vweird.f32 %v1347
        %vm1355 = vmor %vm1353, %vm1354
        %v1356 = vsel %vm1355, %v1347, %v1352
        %v1357 = vmul.f32 %v1330, %v1356
        %v1358 = vmul.f32 %v1331, %v1356
        %v1359 = vmul.f32 %v1332, %v1356
        %v1360 = vmul.f32 %v1333, %v1356
        %v1361 = vmul.f32 %v1334, %v1356
        %v1362 = vmul.f32 %v1335, %v1356
        %v1363 = vmul.f32 %v1336, %v1356
        %v1364 = vmul.f32 %v1337, %v1356
        %v1365 = vmul.f32 %v1338, %v1356
        %v1366 = vmul.f32 %v1339, %v1356
        %v1367 = vmul.f32 %v1340, %v1356
        %v1368 = vmul.f32 %v1341, %v1356
        %v1369 = vmul.f32 %v1342, %v1356
        %v1370 = vmul.f32 %v1343, %v1356
        %v1371 = vmul.f32 %v1344, %v1356
        %v1372 = vmul.f32 %v1345, %v1356
        %v1373 = vmax.f32 %v1357, 0.0
        %v1374 = vmax.f32 %v1358, 0.0
        %v1375 = vmax.f32 %v1359, 0.0
        %v1376 = vmax.f32 %v1360, 0.0
        %v1377 = vmax.f32 %v1361, 0.0
        %v1378 = vmax.f32 %v1362, 0.0
        %v1379 = vmax.f32 %v1363, 0.0
        %v1380 = vmax.f32 %v1364, 0.0
        %v1381 = vmax.f32 %v1365, 0.0
        %v1382 = vmax.f32 %v1366, 0.0
        %v1383 = vmax.f32 %v1367, 0.0
        %v1384 = vmax.f32 %v1368, 0.0
        %v1385 = vmax.f32 %v1369, 0.0
        %v1386 = vmax.f32 %v1370, 0.0
        %v1387 = vmax.f32 %v1371, 0.0
        %v1388 = vmax.f32 %v1372, 0.0
        %v1389 = vpack.c.bf16 %v1374, %v1373
        %v1390 = vpack.c.bf16 %v1376, %v1375
        %v1391 = vpack.c.bf16 %v1378, %v1377
        %v1392 = vpack.c.bf16 %v1380, %v1379
        %v1393 = vpack.c.bf16 %v1382, %v1381
        %v1394 = vpack.c.bf16 %v1384, %v1383
        %v1395 = vpack.c.bf16 %v1386, %v1385
        %v1396 = vpack.c.bf16 %v1388, %v1387
        %1397 = vmatpush.bf16.msra.mxu0 %v1396
        %1398 = vmatpush.bf16.msra.mxu0 %v1395
        %1399 = vmatpush.bf16.msra.mxu0 %v1394
        %1400 = vmatpush.bf16.msra.mxu0 %v1393
        %1401 = vmatpush.bf16.msra.mxu0 %v1392
        %1402 = vmatpush.bf16.msra.mxu0 %v1391
        %1403 = vmatpush.bf16.msra.mxu0 %v1390
        %1404 = vmatpush.bf16.msra.mxu0 %v1389
        %1405 = vmatmul.bf16.gmra.mxu0 %v594
        %v1406 = vpop.f32.mrf.mxu0
        %v1407 = vadd.f32 0.0, %v1406
        %v1408 = vpop.f32.mrf.mxu0
        %v1409 = vadd.f32 0.0, %v1408
        %1410 = vmatmul.bf16.gmra.mxu0 %v595
        %v1411 = vpop.f32.mrf.mxu0
        %v1412 = vadd.f32 0.0, %v1411
        %v1413 = vpop.f32.mrf.mxu0
        %v1414 = vadd.f32 0.0, %v1413
        %1415 = vmatmul.bf16.gmra.mxu0 %v596
        %v1416 = vpop.f32.mrf.mxu0
        %v1417 = vadd.f32 0.0, %v1416
        %v1418 = vpop.f32.mrf.mxu0
        %v1419 = vadd.f32 0.0, %v1418
        %1420 = vmatmul.bf16.gmra.mxu0 %v597
        %v1421 = vpop.f32.mrf.mxu0
        %v1422 = vadd.f32 0.0, %v1421
        %v1423 = vpop.f32.mrf.mxu0
        %v1424 = vadd.f32 0.0, %v1423
        %1425 = vmatmul.bf16.gmra.mxu0 %v598
        %v1426 = vpop.f32.mrf.mxu0
        %v1427 = vadd.f32 0.0, %v1426
        %v1428 = vpop.f32.mrf.mxu0
        %v1429 = vadd.f32 0.0, %v1428
        %1430 = vmatmul.bf16.gmra.mxu0 %v599
        %v1431 = vpop.f32.mrf.mxu0
        %v1432 = vadd.f32 0.0, %v1431
        %v1433 = vpop.f32.mrf.mxu0
        %v1434 = vadd.f32 0.0, %v1433
        %1435 = vmatmul.bf16.gmra.mxu0 %v600
        %v1436 = vpop.f32.mrf.mxu0
        %v1437 = vadd.f32 0.0, %v1436
        %v1438 = vpop.f32.mrf.mxu0
        %v1439 = vadd.f32 0.0, %v1438
        %1440 = vmatmul.bf16.gmra.mxu0 %v601
        %v1441 = vpop.f32.mrf.mxu0
        %v1442 = vadd.f32 0.0, %v1441
        %v1443 = vpop.f32.mrf.mxu0
        %v1444 = vadd.f32 0.0, %v1443
        %1445 = vdwg.mxu0
        %v1446 = vmul.f32 %v1407, %v662
        %v1447 = vmul.f32 %v1409, %v667
        %v1448 = vmul.f32 %v1412, %v672
        %v1449 = vmul.f32 %v1414, %v677
        %v1450 = vmul.f32 %v1417, %v682
        %v1451 = vmul.f32 %v1419, %v687
        %v1452 = vmul.f32 %v1422, %v692
        %v1453 = vmul.f32 %v1424, %v697
        %v1454 = vmul.f32 %v1427, %v702
        %v1455 = vmul.f32 %v1429, %v707
        %v1456 = vmul.f32 %v1432, %v712
        %v1457 = vmul.f32 %v1434, %v717
        %v1458 = vmul.f32 %v1437, %v722
        %v1459 = vmul.f32 %v1439, %v727
        %v1460 = vmul.f32 %v1442, %v732
        %v1461 = vmul.f32 %v1444, %v737
        %s1462 = scalar_lea.vmem %s420, 256 [#allocation5]
        %v1463 = vld [vmem:[%s1462] sm:$0xff]
        %v1464 = vld [vmem:[%s1462 + $0x8] sm:$0xff]
        %v1465 = vld [vmem:[%s1462 + $0x10] sm:$0xff]
        %v1466 = vld [vmem:[%s1462 + $0x18] sm:$0xff]
        %v1467 = vld [vmem:[%s1462 + $0x20] sm:$0xff]
        %v1468 = vld [vmem:[%s1462 + $0x28] sm:$0xff]
        %v1469 = vld [vmem:[%s1462 + $0x30] sm:$0xff]
        %v1470 = vld [vmem:[%s1462 + $0x38] sm:$0xff]
        %v1471 = vld [vmem:[%s1462 + $0x40] sm:$0xff]
        %v1472 = vld [vmem:[%s1462 + $0x48] sm:$0xff]
        %v1473 = vld [vmem:[%s1462 + $0x50] sm:$0xff]
        %v1474 = vld [vmem:[%s1462 + $0x58] sm:$0xff]
        %v1475 = vld [vmem:[%s1462 + $0x60] sm:$0xff]
        %v1476 = vld [vmem:[%s1462 + $0x68] sm:$0xff]
        %v1477 = vld [vmem:[%s1462 + $0x70] sm:$0xff]
        %v1478 = vld [vmem:[%s1462 + $0x78] sm:$0xff]
        %v1479 = vadd.f32 %v1446, %v1463
        %v1480 = vadd.f32 %v1447, %v1464
        %v1481 = vadd.f32 %v1448, %v1465
        %v1482 = vadd.f32 %v1449, %v1466
        %v1483 = vadd.f32 %v1450, %v1467
        %v1484 = vadd.f32 %v1451, %v1468
        %v1485 = vadd.f32 %v1452, %v1469
        %v1486 = vadd.f32 %v1453, %v1470
        %v1487 = vadd.f32 %v1454, %v1471
        %v1488 = vadd.f32 %v1455, %v1472
        %v1489 = vadd.f32 %v1456, %v1473
        %v1490 = vadd.f32 %v1457, %v1474
        %v1491 = vadd.f32 %v1458, %v1475
        %v1492 = vadd.f32 %v1459, %v1476
        %v1493 = vadd.f32 %v1460, %v1477
        %v1494 = vadd.f32 %v1461, %v1478
        %v1495 = vpack.c.bf16 %v1480, %v1479
        %v1496 = vpack.c.bf16 %v1482, %v1481
        %v1497 = vpack.c.bf16 %v1484, %v1483
        %v1498 = vpack.c.bf16 %v1486, %v1485
        %v1499 = vpack.c.bf16 %v1488, %v1487
        %v1500 = vpack.c.bf16 %v1490, %v1489
        %v1501 = vpack.c.bf16 %v1492, %v1491
        %v1502 = vpack.c.bf16 %v1494, %v1493
        %s1503 = scalar_lea.vmem [#allocation7], 128
        %v1504 = vld [vmem:[%s1503] sm:$0xf]
        %v1505 = vld [vmem:[%s1503 + $0x4] sm:$0xf]
        %v1506 = vld [vmem:[%s1503 + $0x8] sm:$0xf]
        %v1507 = vld [vmem:[%s1503 + $0xc] sm:$0xf]
        %v1508 = vld [vmem:[%s1503 + $0x10] sm:$0xf]
        %v1509 = vld [vmem:[%s1503 + $0x14] sm:$0xf]
        %v1510 = vld [vmem:[%s1503 + $0x18] sm:$0xf]
        %v1511 = vld [vmem:[%s1503 + $0x1c] sm:$0xf]
        %v1512 = vld [vmem:[%s1503 + $0x20] sm:$0xf]
        %v1513 = vld [vmem:[%s1503 + $0x24] sm:$0xf]
        %v1514 = vld [vmem:[%s1503 + $0x28] sm:$0xf]
        %v1515 = vld [vmem:[%s1503 + $0x2c] sm:$0xf]
        %v1516 = vld [vmem:[%s1503 + $0x30] sm:$0xf]
        %v1517 = vld [vmem:[%s1503 + $0x34] sm:$0xf]
        %v1518 = vld [vmem:[%s1503 + $0x38] sm:$0xf]
        %v1519 = vld [vmem:[%s1503 + $0x3c] sm:$0xf]
        %s1520 = scalar_lea.vmem %s5, 2
        %v1521 = vld [vmem:[%s1520] sm:$0x1]
        %v1523 = vperm.slane %v1521, 0
        %v1541 = vunpack.c.l.b16 %v1504
        %v1542 = vunpack.c.l.b16 %v1505
        %v1543 = vunpack.c.l.b16 %v1506
        %v1544 = vunpack.c.l.b16 %v1507
        %v1545 = vunpack.c.l.b16 %v1508
        %v1546 = vunpack.c.l.b16 %v1509
        %v1547 = vunpack.c.l.b16 %v1510
        %v1548 = vunpack.c.l.b16 %v1511
        %v1549 = vunpack.c.l.b16 %v1512
        %v1550 = vunpack.c.l.b16 %v1513
        %v1551 = vunpack.c.l.b16 %v1514
        %v1552 = vunpack.c.l.b16 %v1515
        %v1553 = vunpack.c.l.b16 %v1516
        %v1554 = vunpack.c.l.b16 %v1517
        %v1555 = vunpack.c.l.b16 %v1518
        %v1556 = vunpack.c.l.b16 %v1519
        %v1557 = vpack.c.b16 %v1542, %v1541
        %v1558 = vpack.c.b16 %v1544, %v1543
        %v1559 = vpack.c.b16 %v1546, %v1545
        %v1560 = vpack.c.b16 %v1548, %v1547
        %v1561 = vpack.c.b16 %v1550, %v1549
        %v1562 = vpack.c.b16 %v1552, %v1551
        %v1563 = vpack.c.b16 %v1554, %v1553
        %v1564 = vpack.c.b16 %v1556, %v1555
        %1573 = vmatpush.bf16.msra.mxu0 %v1564
        %1574 = vmatpush.bf16.msra.mxu0 %v1563
        %1575 = vmatpush.bf16.msra.mxu0 %v1562
        %1576 = vmatpush.bf16.msra.mxu0 %v1561
        %1577 = vmatpush.bf16.msra.mxu0 %v1560
        %1578 = vmatpush.bf16.msra.mxu0 %v1559
        %1579 = vmatpush.bf16.msra.mxu0 %v1558
        %1580 = vmatpush.bf16.msra.mxu0 %v1557
        %1581 = vmatmul.bf16.gmra.mxu0 %v1495
        %v1582 = vpop.f32.mrf.mxu0
        %v1583 = vadd.f32 %v1523, %v1582
        %v1584 = vpop.f32.mrf.mxu0
        %v1585 = vadd.f32 %v1523, %v1584
        %1586 = vmatmul.bf16.gmra.mxu0 %v1496
        %v1587 = vpop.f32.mrf.mxu0
        %v1588 = vadd.f32 %v1523, %v1587
        %v1589 = vpop.f32.mrf.mxu0
        %v1590 = vadd.f32 %v1523, %v1589
        %1591 = vmatmul.bf16.gmra.mxu0 %v1497
        %v1592 = vpop.f32.mrf.mxu0
        %v1593 = vadd.f32 %v1523, %v1592
        %v1594 = vpop.f32.mrf.mxu0
        %v1595 = vadd.f32 %v1523, %v1594
        %1596 = vmatmul.bf16.gmra.mxu0 %v1498
        %v1597 = vpop.f32.mrf.mxu0
        %v1598 = vadd.f32 %v1523, %v1597
        %v1599 = vpop.f32.mrf.mxu0
        %v1600 = vadd.f32 %v1523, %v1599
        %1601 = vmatmul.bf16.gmra.mxu0 %v1499
        %v1602 = vpop.f32.mrf.mxu0
        %v1603 = vadd.f32 %v1523, %v1602
        %v1604 = vpop.f32.mrf.mxu0
        %v1605 = vadd.f32 %v1523, %v1604
        %1606 = vmatmul.bf16.gmra.mxu0 %v1500
        %v1607 = vpop.f32.mrf.mxu0
        %v1608 = vadd.f32 %v1523, %v1607
        %v1609 = vpop.f32.mrf.mxu0
        %v1610 = vadd.f32 %v1523, %v1609
        %1611 = vmatmul.bf16.gmra.mxu0 %v1501
        %v1612 = vpop.f32.mrf.mxu0
        %v1613 = vadd.f32 %v1523, %v1612
        %v1614 = vpop.f32.mrf.mxu0
        %v1615 = vadd.f32 %v1523, %v1614
        %1616 = vmatmul.bf16.gmra.mxu0 %v1502
        %v1617 = vpop.f32.mrf.mxu0
        %v1618 = vadd.f32 %v1523, %v1617
        %v1619 = vpop.f32.mrf.mxu0
        %v1620 = vadd.f32 %v1523, %v1619
        %1621 = vdwg.mxu0
        %v1622 = vadd.f32 %v1583, %v1585
        %v1623 = vadd.f32 %v1622, %v1588
        %v1624 = vadd.f32 %v1623, %v1590
        %v1625 = vadd.f32 %v1624, %v1593
        %v1626 = vadd.f32 %v1625, %v1595
        %v1627 = vadd.f32 %v1626, %v1598
        %v1628 = vadd.f32 %v1627, %v1600
        %v1629 = vadd.f32 %v1628, %v1603
        %v1630 = vadd.f32 %v1629, %v1605
        %v1631 = vadd.f32 %v1630, %v1608
        %v1632 = vadd.f32 %v1631, %v1610
        %v1633 = vadd.f32 %v1632, %v1613
        %v1634 = vadd.f32 %v1633, %v1615
        %v1635 = vadd.f32 %v1634, %v1618
        %v1636 = vadd.f32 %v1635, %v1620
        %v1637 = vrot.slane %v1636, 4
        %v1638 = vadd.f32 %v1636, %v1637
        %v1639 = vrot.slane %v1638, 2
        %v1640 = vadd.f32 %v1638, %v1639
        %v1641 = vrot.slane %v1640, 1
        %v1642 = vadd.f32 %v1640, %v1641
        %v1643 = vmul.f32 %v1583, %v1583
        %v1644 = vmul.f32 %v1585, %v1585
        %v1645 = vmul.f32 %v1588, %v1588
        %v1646 = vmul.f32 %v1590, %v1590
        %v1647 = vmul.f32 %v1593, %v1593
        %v1648 = vmul.f32 %v1595, %v1595
        %v1649 = vmul.f32 %v1598, %v1598
        %v1650 = vmul.f32 %v1600, %v1600
        %v1651 = vmul.f32 %v1603, %v1603
        %v1652 = vmul.f32 %v1605, %v1605
        %v1653 = vmul.f32 %v1608, %v1608
        %v1654 = vmul.f32 %v1610, %v1610
        %v1655 = vmul.f32 %v1613, %v1613
        %v1656 = vmul.f32 %v1615, %v1615
        %v1657 = vmul.f32 %v1618, %v1618
        %v1658 = vmul.f32 %v1620, %v1620
        %v1659 = vadd.f32 %v1643, %v1644
        %v1660 = vadd.f32 %v1659, %v1645
        %v1661 = vadd.f32 %v1660, %v1646
        %v1662 = vadd.f32 %v1661, %v1647
        %v1663 = vadd.f32 %v1662, %v1648
        %v1664 = vadd.f32 %v1663, %v1649
        %v1665 = vadd.f32 %v1664, %v1650
        %v1666 = vadd.f32 %v1665, %v1651
        %v1667 = vadd.f32 %v1666, %v1652
        %v1668 = vadd.f32 %v1667, %v1653
        %v1669 = vadd.f32 %v1668, %v1654
        %v1670 = vadd.f32 %v1669, %v1655
        %v1671 = vadd.f32 %v1670, %v1656
        %v1672 = vadd.f32 %v1671, %v1657
        %v1673 = vadd.f32 %v1672, %v1658
        %v1674 = vrot.slane %v1673, 4
        %v1675 = vadd.f32 %v1673, %v1674
        %v1676 = vrot.slane %v1675, 2
        %v1677 = vadd.f32 %v1675, %v1676
        %v1678 = vrot.slane %v1677, 1
        %v1679 = vadd.f32 %v1677, %v1678
        %v1680 = vmul.f32 %v1642, 0.0078125
        %v1681 = vmul.f32 %v1679, 0.0078125
        %v1682 = vmul.f32 %v1680, %v1680
        %v1683 = vsub.f32 %v1681, %v1682
        %v1684 = vmax.f32 %v1683, 0.0
        %v1685 = vsub.f32 %v1583, %v1680
        %v1686 = vsub.f32 %v1585, %v1680
        %v1687 = vsub.f32 %v1588, %v1680
        %v1688 = vsub.f32 %v1590, %v1680
        %v1689 = vsub.f32 %v1593, %v1680
        %v1690 = vsub.f32 %v1595, %v1680
        %v1691 = vsub.f32 %v1598, %v1680
        %v1692 = vsub.f32 %v1600, %v1680
        %v1693 = vsub.f32 %v1603, %v1680
        %v1694 = vsub.f32 %v1605, %v1680
        %v1695 = vsub.f32 %v1608, %v1680
        %v1696 = vsub.f32 %v1610, %v1680
        %v1697 = vsub.f32 %v1613, %v1680
        %v1698 = vsub.f32 %v1615, %v1680
        %v1699 = vsub.f32 %v1618, %v1680
        %v1700 = vsub.f32 %v1620, %v1680
        %v1701 = vadd.f32 %v1684, 1e-05
        %v1702 = vrsqrt.pop %v1701
        %v1703 = vmul.f32 %v1702, %v1701
        %v1704 = vmul.f32 %v1703, %v1702
        %v1705 = vmul.f32 0.5, %v1704
        %v1706 = vsub.f32 1.5, %v1705
        %v1707 = vmul.f32 %v1702, %v1706
        %vm1708 = vweird.f32 %v1701
        %vm1709 = vweird.f32 %v1702
        %vm1710 = vmor %vm1708, %vm1709
        %v1711 = vsel %vm1710, %v1702, %v1707
        %v1712 = vmul.f32 %v1685, %v1711
        %v1713 = vmul.f32 %v1686, %v1711
        %v1714 = vmul.f32 %v1687, %v1711
        %v1715 = vmul.f32 %v1688, %v1711
        %v1716 = vmul.f32 %v1689, %v1711
        %v1717 = vmul.f32 %v1690, %v1711
        %v1718 = vmul.f32 %v1691, %v1711
        %v1719 = vmul.f32 %v1692, %v1711
        %v1720 = vmul.f32 %v1693, %v1711
        %v1721 = vmul.f32 %v1694, %v1711
        %v1722 = vmul.f32 %v1695, %v1711
        %v1723 = vmul.f32 %v1696, %v1711
        %v1724 = vmul.f32 %v1697, %v1711
        %v1725 = vmul.f32 %v1698, %v1711
        %v1726 = vmul.f32 %v1699, %v1711
        %v1727 = vmul.f32 %v1700, %v1711
        %v1728 = vmax.f32 %v1712, 0.0
        %v1729 = vmax.f32 %v1713, 0.0
        %v1730 = vmax.f32 %v1714, 0.0
        %v1731 = vmax.f32 %v1715, 0.0
        %v1732 = vmax.f32 %v1716, 0.0
        %v1733 = vmax.f32 %v1717, 0.0
        %v1734 = vmax.f32 %v1718, 0.0
        %v1735 = vmax.f32 %v1719, 0.0
        %v1736 = vmax.f32 %v1720, 0.0
        %v1737 = vmax.f32 %v1721, 0.0
        %v1738 = vmax.f32 %v1722, 0.0
        %v1739 = vmax.f32 %v1723, 0.0
        %v1740 = vmax.f32 %v1724, 0.0
        %v1741 = vmax.f32 %v1725, 0.0
        %v1742 = vmax.f32 %v1726, 0.0
        %v1743 = vmax.f32 %v1727, 0.0
        %v1744 = vld [vmem:[%s435] sm:$0xf]
        %v1745 = vpack.c.bf16 %v1729, %v1728
        %v1746 = vpack.c.bf16 %v1731, %v1730
        %v1747 = vpack.c.bf16 %v1733, %v1732
        %v1748 = vpack.c.bf16 %v1735, %v1734
        %v1749 = vpack.c.bf16 %v1737, %v1736
        %v1750 = vpack.c.bf16 %v1739, %v1738
        %v1751 = vpack.c.bf16 %v1741, %v1740
        %v1752 = vpack.c.bf16 %v1743, %v1742
        %1753 = vmatpush.bf16.msra.mxu0 %v1752
        %1754 = vmatpush.bf16.msra.mxu0 %v1751
        %1755 = vmatpush.bf16.msra.mxu0 %v1750
        %1756 = vmatpush.bf16.msra.mxu0 %v1749
        %1757 = vmatpush.bf16.msra.mxu0 %v1748
        %1758 = vmatpush.bf16.msra.mxu0 %v1747
        %1759 = vmatpush.bf16.msra.mxu0 %v1746
        %1760 = vmatpush.bf16.msra.mxu0 %v1745
        %1761 = vmatmul.bf16.gmra.mxu0 %v1744
        %v1762 = vpop.f32.mrf.mxu0
        %v1763 = vadd.f32 0.0, %v1762
        %v1764 = vpop.f32.mrf.mxu0
        %1765 = vdwg.mxu0
        %v1766 = vpack.c.bf16 %v1763, %v1763
        %v1767 = vld [vmem:[#allocation10] sm:$0xf]
        %v1768 = vld [vmem:[#allocation10 + $0x4] sm:$0xf]
        %v1769 = vld [vmem:[#allocation10 + $0x8] sm:$0xf]
        %v1770 = vld [vmem:[#allocation10 + $0xc] sm:$0xf]
        %v1771 = vld [vmem:[#allocation10 + $0x10] sm:$0xf]
        %v1772 = vld [vmem:[#allocation10 + $0x14] sm:$0xf]
        %v1773 = vld [vmem:[#allocation10 + $0x18] sm:$0xf]
        %v1774 = vld [vmem:[#allocation10 + $0x1c] sm:$0xf]
        %v1775 = vld [vmem:[#allocation10 + $0x20] sm:$0xf]
        %v1776 = vld [vmem:[#allocation10 + $0x24] sm:$0xf]
        %v1777 = vld [vmem:[#allocation10 + $0x28] sm:$0xf]
        %v1778 = vld [vmem:[#allocation10 + $0x2c] sm:$0xf]
        %v1779 = vld [vmem:[#allocation10 + $0x30] sm:$0xf]
        %v1780 = vld [vmem:[#allocation10 + $0x34] sm:$0xf]
        %v1781 = vld [vmem:[#allocation10 + $0x38] sm:$0xf]
        %v1782 = vld [vmem:[#allocation10 + $0x3c] sm:$0xf]
        %v1783 = vld [vmem:[%s8] sm:$0x1]
        %v1785 = vperm.slane %v1783, 0
        %v1803 = vunpack.c.l.b16 %v1767
        %v1804 = vunpack.c.l.b16 %v1768
        %v1805 = vunpack.c.l.b16 %v1769
        %v1806 = vunpack.c.l.b16 %v1770
        %v1807 = vunpack.c.l.b16 %v1771
        %v1808 = vunpack.c.l.b16 %v1772
        %v1809 = vunpack.c.l.b16 %v1773
        %v1810 = vunpack.c.l.b16 %v1774
        %v1811 = vunpack.c.l.b16 %v1775
        %v1812 = vunpack.c.l.b16 %v1776
        %v1813 = vunpack.c.l.b16 %v1777
        %v1814 = vunpack.c.l.b16 %v1778
        %v1815 = vunpack.c.l.b16 %v1779
        %v1816 = vunpack.c.l.b16 %v1780
        %v1817 = vunpack.c.l.b16 %v1781
        %v1818 = vunpack.c.l.b16 %v1782
        %v1819 = vpack.c.b16 %v1804, %v1803
        %v1820 = vpack.c.b16 %v1806, %v1805
        %v1821 = vpack.c.b16 %v1808, %v1807
        %v1822 = vpack.c.b16 %v1810, %v1809
        %v1823 = vpack.c.b16 %v1812, %v1811
        %v1824 = vpack.c.b16 %v1814, %v1813
        %v1825 = vpack.c.b16 %v1816, %v1815
        %v1826 = vpack.c.b16 %v1818, %v1817
        %1835 = vmatpush.bf16.msra.mxu0 %v1826
        %1836 = vmatpush.bf16.msra.mxu0 %v1825
        %1837 = vmatpush.bf16.msra.mxu0 %v1824
        %1838 = vmatpush.bf16.msra.mxu0 %v1823
        %1839 = vmatpush.bf16.msra.mxu0 %v1822
        %1840 = vmatpush.bf16.msra.mxu0 %v1821
        %1841 = vmatpush.bf16.msra.mxu0 %v1820
        %1842 = vmatpush.bf16.msra.mxu0 %v1819
        %1843 = vmatmul.bf16.gmra.mxu0 %v1766
        %v1844 = vpop.f32.mrf.mxu0
        %v1845 = vadd.f32 %v1785, %v1844
        %v1846 = vpop.f32.mrf.mxu0
        %1847 = vdwg.mxu0
        %1848 = vst [vmem:[%s495] sm:$0xff] %v1845
        %s1849 = sand.u32 %s254, 1
        %s1850 = scalar_lea.sflag [#allocation4], %s1849
        %s1851 = sand.u32 %s254, 1
        %s1852 = smul.addr %s1851, 8
        %s1853 = scalar_lea.vmem [#allocation11], %s1852
        // Predicated region
        $region77: #{tpu_custom_call.1} parent=55 // pred_check
          %p1854 = pneg %p264
        $region78: #{tpu_custom_call.1} parent=55 // pred_check_branch
          %1856 = sbr.rel (%p1854) target = $region80
        $region79: #{tpu_custom_call.1} parent=55 // pred_region
          %1858 = vsyncadd %s1850, 0
          %s1859 = smul.addr %s32, 8
          %s1860 = scalar_lea.hbm %s9, %s1859
          %s1862 = sshll.u32 %s1853, 4
          %s1863 = int_to_ptr.vmem [resolvable:$true] %s1862
          %s1864 = sshll.u32 %s1860, 4
          %s1865 = int_to_ptr.hbm [resolvable:$true] %s1864
          %1867 = dma.vmem_to_hbm [thread:$0]  %s1863, 128, %s1865, %s1850
        $region80: #{tpu_custom_call.1} parent=55 // pred_fallthru
          _
      $region56: #{tpu_custom_call.1} parent=5 // pred_fallthru
        _
      %p1868 = scmp.le.s32.totalorder 2, %s27
      // Predicated region
      $region81: #{tpu_custom_call.1} parent=5 // pred_check
        %p1869 = pneg %p1868
      $region82: #{tpu_custom_call.1} parent=5 // pred_check_branch
        %1871 = sbr.rel (%p1869) target = $region84
      $region83: #{tpu_custom_call.1} parent=5 // pred_region
        %s1872 = ssub.s32 %s27, 2
        // Predicated region
        $region85: #{tpu_custom_call.1} parent=83 // pred_check
          %p1873 = pneg %p270
        $region86: #{tpu_custom_call.1} parent=83 // pred_check_branch
          %1875 = sbr.rel (%p1873) target = $region88
        $region87: #{tpu_custom_call.1} parent=83 // pred_region
          %s1876 = sand.u32 %s255, 1
          %s1877 = scalar_lea.sflag [#allocation4], %s1876
          %s1878 = sand.u32 %s255, 1
          %s1879 = smul.addr %s1878, 8
          %s1880 = scalar_lea.vmem [#allocation11], %s1879
          %1882 = dma.done %s1877, 128
        $region88: #{tpu_custom_call.1} parent=83 // pred_fallthru
          _
      $region84: #{tpu_custom_call.1} parent=5 // pred_fallthru
        _
    $region6: #{tpu_custom_call.1} parent=1 // loop_footer
      %s31 = sadd.s32 1, %s27
    $region7: #{tpu_custom_call.1} parent=1 // loop_footer_branch
      %26 = sbr.rel target = $region3
    $region8: #{tpu_custom_call.1} parent=1 // loop_exit
      _
    %1883 = vsyncpa [#allocation3], 1
    %s1884 = scalar_lea.sflag [#allocation3], 1
    %1885 = vsyncpa %s1884, 1
    %1886 = vsyncpa [#allocation6], 1
    %s1887 = scalar_lea.sflag [#allocation6], 1
    %1888 = vsyncpa %s1887, 1
    %1889 = vsyncpa [#allocation9], 1
    %s1890 = scalar_lea.sflag [#allocation9], 1
    %1891 = vsyncpa %s1890, 1
    %1892 = vsyncpa [#allocation4], 1
    %s1893 = scalar_lea.sflag [#allocation4], 1
    %1894 = vsyncpa %s1893, 1

</llo_original>
